<compile_context>
chip_gen: v7x
topology: tpu7x:2x2x1
jax: 0.10.0
libtpu: 0.0.40
codegen_flags: <defaults>
</compile_context>

<pallas_src>
import functools

import jax
import jax.numpy as jnp
from jax import lax
from jax.experimental import pallas as pl
from jax.experimental.pallas import tpu as pltpu


# --------------------------------------------------------------------------- #
# In-kernel helpers
# --------------------------------------------------------------------------- #
def _pool_same_max_1d(a, k, axis):
    """Stride-1 'same'-size max pool of width k along `axis`.

    Zero boundary is the identity for max because values are in {0, 1}.
    Cost: one concatenate + (k-1) full-array maxes per axis.
    """
    if k <= 1:
        return a
    p = k // 2
    n = a.shape[axis]
    zshape = list(a.shape)
    zshape[axis] = p
    z = jnp.zeros(zshape, a.dtype)
    ap = jnp.concatenate([z, a, z], axis=axis)
    out = lax.slice_in_dim(ap, 0, n, axis=axis)
    for d in range(1, k):
        out = jnp.maximum(out, lax.slice_in_dim(ap, d, d + n, axis=axis))
    return out


def _keep_mask(bern_i8, block_k):
    """keep = 1 - maxpool_kxk(bern) for a (tb, H, W, tc) channel-last tile."""
    bern = bern_i8.astype(jnp.float32)
    bm = _pool_same_max_1d(bern, block_k, axis=1)  # along H (major axis, cheap)
    bm = _pool_same_max_1d(bm, block_k, axis=2)    # along W (sublane axis)
    return 1.0 - bm


# --------------------------------------------------------------------------- #
# Kernels
# --------------------------------------------------------------------------- #
def _dropblock_sum_kernel(bern_ref, psum_ref, *, block_k):
    """Pass 1: per-tile sum of the keep mask -> SMEM scalar output."""
    keep = _keep_mask(bern_ref[...], block_k)
    psum_ref[0, 0] = jnp.sum(keep)


def _dropblock_apply_kernel(scale_ref, bern_ref, x_ref, o_ref, *, block_k):
    """Pass 2: out = x * keep * scale (scale is the global normalization)."""
    keep = _keep_mask(bern_ref[...], block_k)
    xf = x_ref[...].astype(jnp.float32)
    o_ref[...] = (xf * keep * scale_ref[0]).astype(o_ref.dtype)


# --------------------------------------------------------------------------- #
# Wrapper
# --------------------------------------------------------------------------- #
def _pick_divisor_tile(n, max_tile):
    t = max(1, min(n, max_tile))
    while n % t:
        t -= 1
    return t


def _pick_channel_tile(c):
    # Last block dim must be a multiple of 128 or the full extent.
    if c <= 512:
        return c
    for t in (512, 384, 256, 128):
        if c % t == 0:
            return t
    return c


def drop_block_2d_pallas(
    x,
    key,
    drop_prob: float = 0.1,
    block_size: int = 7,
    gamma_scale: float = 1.0,
    training: bool = True,
):
    """DropBlock2d.forward (fast=True, with_noise=False) on TPU via Pallas."""
    if not training or drop_prob == 0.0:
        return x

    b, c, h, w = x.shape
    total_size = w * h
    clipped = min(block_size, min(w, h))
    assert (w - block_size + 1) > 0 and (h - block_size + 1) > 0, (
        "drop_block gamma is undefined when spatial dims are smaller than block_size"
    )
    assert clipped % 2 == 1, "same-shape max-pool assumes an odd clipped block size"
    gamma = (
        gamma_scale
        * drop_prob
        * total_size
        / clipped**2
        / ((w - block_size + 1) * (h - block_size + 1))
    )

    # Channel-last so the lane axis is C (lane-dense stores; pool shifts stay
    # off the lane axis).
    x_nhwc = jnp.transpose(x, (0, 2, 3, 1))

    # Bernoulli(gamma) mask as a compact int8 {0,1} tensor (exact; both passes
    # read the same bits, so randomness is consistent across tiles/passes).
    u = jax.random.uniform(key, (b, h, w, c), dtype=jnp.float32)
    bern = (u < jnp.float32(gamma)).astype(jnp.int8)

    # Tile over (B, C); pooling is independent per (b, c) so no halos needed.
    tc = _pick_channel_tile(c)
    per_b_bytes = h * w * tc * 4
    tb = _pick_divisor_tile(b, max(1, (1 << 20) // max(per_b_bytes, 1)))
    gb, gc = b // tb, c // tc

    cparams = pltpu.CompilerParams(
        dimension_semantics=("parallel", "parallel"),
        vmem_limit_bytes=32 * 1024 * 1024,
    )
    block_map = lambda i, j: (i, 0, 0, j)

    # ---- pass 1: global sum(keep) --------------------------------------- #
    psum = pl.pallas_call(
        functools.partial(_dropblock_sum_kernel, block_k=clipped),
        out_shape=jax.ShapeDtypeStruct((gb, gc), jnp.float32),
        grid=(gb, gc),
        in_specs=[pl.BlockSpec((tb, h, w, tc), block_map)],
        out_specs=pl.BlockSpec((1, 1), lambda i, j: (i, j), memory_space=pltpu.SMEM),
        compiler_params=cparams,
    )(bern)

    numel = b * c * h * w
    scale = jnp.reshape(numel / (jnp.sum(psum) + 1e-6), (1,)).astype(jnp.float32)

    # ---- pass 2: out = x * keep * scale ---------------------------------- #
    out_nhwc = pl.pallas_call(
        functools.partial(_dropblock_apply_kernel, block_k=clipped),
        out_shape=jax.ShapeDtypeStruct((b, h, w, c), x.dtype),
        grid=(gb, gc),
        in_specs=[
            pl.BlockSpec(memory_space=pltpu.SMEM),       # global scale scalar
            pl.BlockSpec((tb, h, w, tc), block_map),     # bern mask (int8)
            pl.BlockSpec((tb, h, w, tc), block_map),     # x
        ],
        out_specs=pl.BlockSpec((tb, h, w, tc), block_map),
        compiler_params=cparams,
    )(scale, bern, x_nhwc)

    return jnp.transpose(out_nhwc, (0, 3, 1, 2))


# --------------------------------------------------------------------------- #
# Pure-JAX reference (same randomness) for correctness checking
# --------------------------------------------------------------------------- #
def _reference(x, key, drop_prob=0.1, block_size=7, gamma_scale=1.0):
    b, c, h, w = x.shape
    clipped = min(block_size, min(w, h))
    gamma = (
        gamma_scale * drop_prob * (w * h) / clipped**2
        / ((w - block_size + 1) * (h - block_size + 1))
    )
    x_nhwc = jnp.transpose(x, (0, 2, 3, 1))
    u = jax.random.uniform(key, (b, h, w, c), dtype=jnp.float32)
    bern = (u < jnp.float32(gamma)).astype(jnp.float32)
    p = clipped // 2
    bm = lax.reduce_window(
        bern, -jnp.inf, lax.max,
        (1, clipped, clipped, 1), (1, 1, 1, 1),
        [(0, 0), (p, p), (p, p), (0, 0)],
    )
    keep = 1.0 - bm
    scale = (b * c * h * w) / (jnp.sum(keep) + 1e-6)
    out = x_nhwc * keep * scale
    return jnp.transpose(out, (0, 3, 1, 2)).astype(x.dtype)


if __name__ == "__main__":
    key = jax.random.PRNGKey(0)
    kx, kd = jax.random.split(key)
    x = jax.random.normal(kx, (2, 4, 16, 16), dtype=jnp.float32)

    y = drop_block_2d_pallas(x, kd, drop_prob=0.1, block_size=7, training=True)
    y = jax.block_until_ready(y)
    assert y.shape == x.shape and y.dtype == x.dtype

    y_ref = _reference(x, kd, drop_prob=0.1, block_size=7)
    assert jnp.allclose(y, y_ref, rtol=1e-5, atol=1e-5), float(
        jnp.max(jnp.abs(y - y_ref))
    )

    # eval-mode path: identity
    y_eval = drop_block_2d_pallas(x, kd, training=False)
    assert jnp.array_equal(y_eval, x)

    print("KERNEL_OK")
</pallas_src>

<mosaic_0001>
module attributes {stable_mosaic.version = 11 : i64} {
  func.func @_dropblock_sum_kernel(%arg0: i32, %arg1: i32, %arg2: memref<2x16x16x4xi8, #tpu.memory_space<vmem>>, %arg3: memref<1x1xf32, #tpu.memory_space<smem>>) attributes {dimension_semantics = [#tpu.dimension_semantics<parallel>, #tpu.dimension_semantics<parallel>], iteration_bounds = array<i64: 1, 1>, scalar_prefetch = 0 : i64, scratch_operands = 0 : i64, tpu.core_type = #tpu.core_type<tc>, window_params = [{transform_indices = @transform_0, window_bounds = array<i64: 2, 16, 16, 4>}, {transform_indices = @transform_1, window_bounds = array<i64: 1, 1>}]} {
    %c0 = arith.constant 0 : index
    %c0_0 = arith.constant 0 : index
    %c0_1 = arith.constant 0 : index
    %c0_2 = arith.constant 0 : index
    %0 = vector.load %arg2[%c0, %c0_0, %c0_1, %c0_2] : memref<2x16x16x4xi8, #tpu.memory_space<vmem>>, vector<2x16x16x4xi8>
    %1 = arith.sitofp %0 : vector<2x16x16x4xi8> to vector<2x16x16x4xf32>
    %cst = arith.constant 0.000000e+00 : f32
    %2 = vector.broadcast %cst : f32 to vector<2x3x16x4xf32>
    %3 = tpu.concatenate %2, %1, %2 in 1 : vector<2x3x16x4xf32>, vector<2x16x16x4xf32>, vector<2x3x16x4xf32> -> vector<2x22x16x4xf32>
    %4 = vector.extract_strided_slice %3 {offsets = [0, 0, 0, 0], sizes = [2, 16, 16, 4], strides = [1, 1, 1, 1]} : vector<2x22x16x4xf32> to vector<2x16x16x4xf32>
    %5 = vector.extract_strided_slice %3 {offsets = [0, 1, 0, 0], sizes = [2, 16, 16, 4], strides = [1, 1, 1, 1]} : vector<2x22x16x4xf32> to vector<2x16x16x4xf32>
    %6 = arith.maximumf %4, %5 : vector<2x16x16x4xf32>
    %7 = vector.extract_strided_slice %3 {offsets = [0, 2, 0, 0], sizes = [2, 16, 16, 4], strides = [1, 1, 1, 1]} : vector<2x22x16x4xf32> to vector<2x16x16x4xf32>
    %8 = arith.maximumf %6, %7 : vector<2x16x16x4xf32>
    %9 = vector.extract_strided_slice %3 {offsets = [0, 3, 0, 0], sizes = [2, 16, 16, 4], strides = [1, 1, 1, 1]} : vector<2x22x16x4xf32> to vector<2x16x16x4xf32>
    %10 = arith.maximumf %8, %9 : vector<2x16x16x4xf32>
    %11 = vector.extract_strided_slice %3 {offsets = [0, 4, 0, 0], sizes = [2, 16, 16, 4], strides = [1, 1, 1, 1]} : vector<2x22x16x4xf32> to vector<2x16x16x4xf32>
    %12 = arith.maximumf %10, %11 : vector<2x16x16x4xf32>
    %13 = vector.extract_strided_slice %3 {offsets = [0, 5, 0, 0], sizes = [2, 16, 16, 4], strides = [1, 1, 1, 1]} : vector<2x22x16x4xf32> to vector<2x16x16x4xf32>
    %14 = arith.maximumf %12, %13 : vector<2x16x16x4xf32>
    %15 = vector.extract_strided_slice %3 {offsets = [0, 6, 0, 0], sizes = [2, 16, 16, 4], strides = [1, 1, 1, 1]} : vector<2x22x16x4xf32> to vector<2x16x16x4xf32>
    %16 = arith.maximumf %14, %15 : vector<2x16x16x4xf32>
    %cst_3 = arith.constant 0.000000e+00 : f32
    %17 = vector.broadcast %cst_3 : f32 to vector<2x16x3x4xf32>
    %18 = tpu.concatenate %17, %16, %17 in 2 : vector<2x16x3x4xf32>, vector<2x16x16x4xf32>, vector<2x16x3x4xf32> -> vector<2x16x22x4xf32>
    %19 = vector.extract_strided_slice %18 {offsets = [0, 0, 0, 0], sizes = [2, 16, 16, 4], strides = [1, 1, 1, 1]} : vector<2x16x22x4xf32> to vector<2x16x16x4xf32>
    %20 = vector.extract_strided_slice %18 {offsets = [0, 0, 1, 0], sizes = [2, 16, 16, 4], strides = [1, 1, 1, 1]} : vector<2x16x22x4xf32> to vector<2x16x16x4xf32>
    %21 = arith.maximumf %19, %20 : vector<2x16x16x4xf32>
    %22 = vector.extract_strided_slice %18 {offsets = [0, 0, 2, 0], sizes = [2, 16, 16, 4], strides = [1, 1, 1, 1]} : vector<2x16x22x4xf32> to vector<2x16x16x4xf32>
    %23 = arith.maximumf %21, %22 : vector<2x16x16x4xf32>
    %24 = vector.extract_strided_slice %18 {offsets = [0, 0, 3, 0], sizes = [2, 16, 16, 4], strides = [1, 1, 1, 1]} : vector<2x16x22x4xf32> to vector<2x16x16x4xf32>
    %25 = arith.maximumf %23, %24 : vector<2x16x16x4xf32>
    %26 = vector.extract_strided_slice %18 {offsets = [0, 0, 4, 0], sizes = [2, 16, 16, 4], strides = [1, 1, 1, 1]} : vector<2x16x22x4xf32> to vector<2x16x16x4xf32>
    %27 = arith.maximumf %25, %26 : vector<2x16x16x4xf32>
    %28 = vector.extract_strided_slice %18 {offsets = [0, 0, 5, 0], sizes = [2, 16, 16, 4], strides = [1, 1, 1, 1]} : vector<2x16x22x4xf32> to vector<2x16x16x4xf32>
    %29 = arith.maximumf %27, %28 : vector<2x16x16x4xf32>
    %30 = vector.extract_strided_slice %18 {offsets = [0, 0, 6, 0], sizes = [2, 16, 16, 4], strides = [1, 1, 1, 1]} : vector<2x16x22x4xf32> to vector<2x16x16x4xf32>
    %31 = arith.maximumf %29, %30 : vector<2x16x16x4xf32>
    %cst_4 = arith.constant 1.000000e+00 : f32
    %32 = vector.broadcast %cst_4 : f32 to vector<2x16x16x4xf32>
    %33 = arith.subf %32, %31 : vector<2x16x16x4xf32>
    %34 = vector.shape_cast %33 : vector<2x16x16x4xf32> to vector<1x2x16x16x4xf32>
    %cst_5 = arith.constant dense<0.000000e+00> : vector<1xf32>
    %35 = vector.multi_reduction <add>, %34, %cst_5 [1, 2, 3, 4] : vector<1x2x16x16x4xf32> to vector<1xf32>
    %36 = vector.shape_cast %35 : vector<1xf32> to vector<1x1x1x1x1xf32>
    %37 = vector.extract %36[0, 0, 0, 0, 0] : f32 from vector<1x1x1x1x1xf32>
    %c0_6 = arith.constant 0 : index
    %c0_7 = arith.constant 0 : index
    %38 = memref.load %arg3[%c0_6, %c0_7] : memref<1x1xf32, #tpu.memory_space<smem>>
    memref.store %37, %arg3[%c0_6, %c0_7] : memref<1x1xf32, #tpu.memory_space<smem>>
    return
  }
  func.func @transform_0(%arg0: i32, %arg1: i32) -> (i32, i32, i32, i32) {
    %c0_i32 = arith.constant 0 : i32
    %c0_i32_0 = arith.constant 0 : i32
    %c0_i32_1 = arith.constant 0 : i32
    return %arg0, %c0_i32, %c0_i32_0, %arg1 : i32, i32, i32, i32
  }
  func.func @transform_1(%arg0: i32, %arg1: i32) -> (i32, i32) {
    %c0_i32 = arith.constant 0 : i32
    return %arg0, %arg1 : i32, i32
  }
}

</mosaic_0001>

<llo_original>
// kernel: tpu_custom_call.1
$region0: #{tpu_custom_call.1}
  #allocation0 [shape = 'u32[]', space=smem, size = 0x4, offset = 0x4, fixed_abs, tag = 'smem constant byte address 0x4 - core index']
  #allocation1 [shape = 'u32[144,128]{1,0:T(1,128)}', space=vmem, size = 0x12000, scoped, tag = 'internal scratch']
  %s0 = inlined_call_operand.vmem [shape: s8[2,16,16,4], index: 0, kind: input, shape index: {}]
  %s1 = inlined_call_operand.hbm [shape: f32[1,1], index: 1, kind: output, shape index: {}]
  %s2 = sld [smem:[#allocation0]]
  $region14: #{tpu_custom_call.1} parent=0
    _
  %s4 = ssub.s32 1, %s2
  %s5 = scalar_select 0, %s4, %s2
  $region1: #{tpu_custom_call.1} parent=0
    #allocation2 [shape = 'u8[512]{0}', space=smem, size = 0x200, scoped, tag = 'output window, operand 0, single buffered']
    #allocation3 [shape = 's32[1]{0}', space=sflag, size = 0x4, scoped, tag = 'scoped memory for tpu_custom_call.1']
    %6 = vsyncpa [#allocation3], 0
    // Predicated region
    $region2: #{tpu_custom_call.1} parent=1 // pred_check
      _
    $region3: #{tpu_custom_call.1} parent=1 // pred_check_branch
      %8 = sbr.rel (0) target = $region5
    $region4: #{tpu_custom_call.1} parent=1 // pred_region
      _
    $region5: #{tpu_custom_call.1} parent=1 // pred_fallthru
      _
    %v9 = vld [vmem:[%s0] sm:$0x3]
    %v10 = vld [vmem:[%s0 + $0x2] sm:$0x3]
    %v11 = vld [vmem:[%s0 + $0x4] sm:$0x3]
    %v12 = vld [vmem:[%s0 + $0x6] sm:$0x3]
    %v13 = vld [vmem:[%s0 + $0x8] sm:$0x3]
    %v14 = vld [vmem:[%s0 + $0xa] sm:$0x3]
    %v15 = vld [vmem:[%s0 + $0xc] sm:$0x3]
    %v16 = vld [vmem:[%s0 + $0xe] sm:$0x3]
    %v17 = vld [vmem:[%s0 + $0x10] sm:$0x3]
    %v18 = vld [vmem:[%s0 + $0x12] sm:$0x3]
    %v19 = vld [vmem:[%s0 + $0x14] sm:$0x3]
    %v20 = vld [vmem:[%s0 + $0x16] sm:$0x3]
    %v21 = vld [vmem:[%s0 + $0x18] sm:$0x3]
    %v22 = vld [vmem:[%s0 + $0x1a] sm:$0x3]
    %v23 = vld [vmem:[%s0 + $0x1c] sm:$0x3]
    %v24 = vld [vmem:[%s0 + $0x1e] sm:$0x3]
    %v25 = vld [vmem:[%s0 + $0x20] sm:$0x3]
    %v26 = vld [vmem:[%s0 + $0x22] sm:$0x3]
    %v27 = vld [vmem:[%s0 + $0x24] sm:$0x3]
    %v28 = vld [vmem:[%s0 + $0x26] sm:$0x3]
    %v29 = vld [vmem:[%s0 + $0x28] sm:$0x3]
    %v30 = vld [vmem:[%s0 + $0x2a] sm:$0x3]
    %v31 = vld [vmem:[%s0 + $0x2c] sm:$0x3]
    %v32 = vld [vmem:[%s0 + $0x2e] sm:$0x3]
    %v33 = vld [vmem:[%s0 + $0x30] sm:$0x3]
    %v34 = vld [vmem:[%s0 + $0x32] sm:$0x3]
    %v35 = vld [vmem:[%s0 + $0x34] sm:$0x3]
    %v36 = vld [vmem:[%s0 + $0x36] sm:$0x3]
    %v37 = vld [vmem:[%s0 + $0x38] sm:$0x3]
    %v38 = vld [vmem:[%s0 + $0x3a] sm:$0x3]
    %v39 = vld [vmem:[%s0 + $0x3c] sm:$0x3]
    %v40 = vld [vmem:[%s0 + $0x3e] sm:$0x3]
    %v41 = vld [vmem:[%s0 + $0x40] sm:$0x3]
    %v42 = vld [vmem:[%s0 + $0x42] sm:$0x3]
    %v43 = vld [vmem:[%s0 + $0x44] sm:$0x3]
    %v44 = vld [vmem:[%s0 + $0x46] sm:$0x3]
    %v45 = vld [vmem:[%s0 + $0x48] sm:$0x3]
    %v46 = vld [vmem:[%s0 + $0x4a] sm:$0x3]
    %v47 = vld [vmem:[%s0 + $0x4c] sm:$0x3]
    %v48 = vld [vmem:[%s0 + $0x4e] sm:$0x3]
    %v49 = vld [vmem:[%s0 + $0x50] sm:$0x3]
    %v50 = vld [vmem:[%s0 + $0x52] sm:$0x3]
    %v51 = vld [vmem:[%s0 + $0x54] sm:$0x3]
    %v52 = vld [vmem:[%s0 + $0x56] sm:$0x3]
    %v53 = vld [vmem:[%s0 + $0x58] sm:$0x3]
    %v54 = vld [vmem:[%s0 + $0x5a] sm:$0x3]
    %v55 = vld [vmem:[%s0 + $0x5c] sm:$0x3]
    %v56 = vld [vmem:[%s0 + $0x5e] sm:$0x3]
    %v57 = vld [vmem:[%s0 + $0x60] sm:$0x3]
    %v58 = vld [vmem:[%s0 + $0x62] sm:$0x3]
    %v59 = vld [vmem:[%s0 + $0x64] sm:$0x3]
    %v60 = vld [vmem:[%s0 + $0x66] sm:$0x3]
    %v61 = vld [vmem:[%s0 + $0x68] sm:$0x3]
    %v62 = vld [vmem:[%s0 + $0x6a] sm:$0x3]
    %v63 = vld [vmem:[%s0 + $0x6c] sm:$0x3]
    %v64 = vld [vmem:[%s0 + $0x6e] sm:$0x3]
    %v65 = vld [vmem:[%s0 + $0x70] sm:$0x3]
    %v66 = vld [vmem:[%s0 + $0x72] sm:$0x3]
    %v67 = vld [vmem:[%s0 + $0x74] sm:$0x3]
    %v68 = vld [vmem:[%s0 + $0x76] sm:$0x3]
    %v69 = vld [vmem:[%s0 + $0x78] sm:$0x3]
    %v70 = vld [vmem:[%s0 + $0x7a] sm:$0x3]
    %v71 = vld [vmem:[%s0 + $0x7c] sm:$0x3]
    %v72 = vld [vmem:[%s0 + $0x7e] sm:$0x3]
    %v73 = vunpack.c.0.s8 %v9
    %v74 = vunpack.c.0.s8 %v10
    %v75 = vunpack.c.0.s8 %v11
    %v76 = vunpack.c.0.s8 %v12
    %v77 = vunpack.c.0.s8 %v13
    %v78 = vunpack.c.0.s8 %v14
    %v79 = vunpack.c.0.s8 %v15
    %v80 = vunpack.c.0.s8 %v16
    %v81 = vunpack.c.0.s8 %v17
    %v82 = vunpack.c.0.s8 %v18
    %v83 = vunpack.c.0.s8 %v19
    %v84 = vunpack.c.0.s8 %v20
    %v85 = vunpack.c.0.s8 %v21
    %v86 = vunpack.c.0.s8 %v22
    %v87 = vunpack.c.0.s8 %v23
    %v88 = vunpack.c.0.s8 %v24
    %v89 = vunpack.c.0.s8 %v25
    %v90 = vunpack.c.0.s8 %v26
    %v91 = vunpack.c.0.s8 %v27
    %v92 = vunpack.c.0.s8 %v28
    %v93 = vunpack.c.0.s8 %v29
    %v94 = vunpack.c.0.s8 %v30
    %v95 = vunpack.c.0.s8 %v31
    %v96 = vunpack.c.0.s8 %v32
    %v97 = vunpack.c.0.s8 %v33
    %v98 = vunpack.c.0.s8 %v34
    %v99 = vunpack.c.0.s8 %v35
    %v100 = vunpack.c.0.s8 %v36
    %v101 = vunpack.c.0.s8 %v37
    %v102 = vunpack.c.0.s8 %v38
    %v103 = vunpack.c.0.s8 %v39
    %v104 = vunpack.c.0.s8 %v40
    %v105 = vunpack.c.0.s8 %v41
    %v106 = vunpack.c.0.s8 %v42
    %v107 = vunpack.c.0.s8 %v43
    %v108 = vunpack.c.0.s8 %v44
    %v109 = vunpack.c.0.s8 %v45
    %v110 = vunpack.c.0.s8 %v46
    %v111 = vunpack.c.0.s8 %v47
    %v112 = vunpack.c.0.s8 %v48
    %v113 = vunpack.c.0.s8 %v49
    %v114 = vunpack.c.0.s8 %v50
    %v115 = vunpack.c.0.s8 %v51
    %v116 = vunpack.c.0.s8 %v52
    %v117 = vunpack.c.0.s8 %v53
    %v118 = vunpack.c.0.s8 %v54
    %v119 = vunpack.c.0.s8 %v55
    %v120 = vunpack.c.0.s8 %v56
    %v121 = vunpack.c.0.s8 %v57
    %v122 = vunpack.c.0.s8 %v58
    %v123 = vunpack.c.0.s8 %v59
    %v124 = vunpack.c.0.s8 %v60
    %v125 = vunpack.c.0.s8 %v61
    %v126 = vunpack.c.0.s8 %v62
    %v127 = vunpack.c.0.s8 %v63
    %v128 = vunpack.c.0.s8 %v64
    %v129 = vunpack.c.0.s8 %v65
    %v130 = vunpack.c.0.s8 %v66
    %v131 = vunpack.c.0.s8 %v67
    %v132 = vunpack.c.0.s8 %v68
    %v133 = vunpack.c.0.s8 %v69
    %v134 = vunpack.c.0.s8 %v70
    %v135 = vunpack.c.0.s8 %v71
    %v136 = vunpack.c.0.s8 %v72
    %v137 = vcvt.s32.f32 %v73
    %v138 = vcvt.s32.f32 %v74
    %v139 = vcvt.s32.f32 %v75
    %v140 = vcvt.s32.f32 %v76
    %v141 = vcvt.s32.f32 %v77
    %v142 = vcvt.s32.f32 %v78
    %v143 = vcvt.s32.f32 %v79
    %v144 = vcvt.s32.f32 %v80
    %v145 = vcvt.s32.f32 %v81
    %v146 = vcvt.s32.f32 %v82
    %v147 = vcvt.s32.f32 %v83
    %v148 = vcvt.s32.f32 %v84
    %v149 = vcvt.s32.f32 %v85
    %v150 = vcvt.s32.f32 %v86
    %v151 = vcvt.s32.f32 %v87
    %v152 = vcvt.s32.f32 %v88
    %v153 = vcvt.s32.f32 %v89
    %v154 = vcvt.s32.f32 %v90
    %v155 = vcvt.s32.f32 %v91
    %v156 = vcvt.s32.f32 %v92
    %v157 = vcvt.s32.f32 %v93
    %v158 = vcvt.s32.f32 %v94
    %v159 = vcvt.s32.f32 %v95
    %v160 = vcvt.s32.f32 %v96
    %v161 = vcvt.s32.f32 %v97
    %v162 = vcvt.s32.f32 %v98
    %v163 = vcvt.s32.f32 %v99
    %v164 = vcvt.s32.f32 %v100
    %v165 = vcvt.s32.f32 %v101
    %v166 = vcvt.s32.f32 %v102
    %v167 = vcvt.s32.f32 %v103
    %v168 = vcvt.s32.f32 %v104
    %v169 = vcvt.s32.f32 %v105
    %v170 = vcvt.s32.f32 %v106
    %v171 = vcvt.s32.f32 %v107
    %v172 = vcvt.s32.f32 %v108
    %v173 = vcvt.s32.f32 %v109
    %v174 = vcvt.s32.f32 %v110
    %v175 = vcvt.s32.f32 %v111
    %v176 = vcvt.s32.f32 %v112
    %v177 = vcvt.s32.f32 %v113
    %v178 = vcvt.s32.f32 %v114
    %v179 = vcvt.s32.f32 %v115
    %v180 = vcvt.s32.f32 %v116
    %v181 = vcvt.s32.f32 %v117
    %v182 = vcvt.s32.f32 %v118
    %v183 = vcvt.s32.f32 %v119
    %v184 = vcvt.s32.f32 %v120
    %v185 = vcvt.s32.f32 %v121
    %v186 = vcvt.s32.f32 %v122
    %v187 = vcvt.s32.f32 %v123
    %v188 = vcvt.s32.f32 %v124
    %v189 = vcvt.s32.f32 %v125
    %v190 = vcvt.s32.f32 %v126
    %v191 = vcvt.s32.f32 %v127
    %v192 = vcvt.s32.f32 %v128
    %v193 = vcvt.s32.f32 %v129
    %v194 = vcvt.s32.f32 %v130
    %v195 = vcvt.s32.f32 %v131
    %v196 = vcvt.s32.f32 %v132
    %v197 = vcvt.s32.f32 %v133
    %v198 = vcvt.s32.f32 %v134
    %v199 = vcvt.s32.f32 %v135
    %v200 = vcvt.s32.f32 %v136
    %v201 = vmax.f32 %v137, 0.0
    %v202 = vmax.f32 %v138, 0.0
    %v203 = vmax.f32 %v137, %v139
    %v204 = vmax.f32 %v138, %v140
    %v205 = vmax.f32 %v139, %v141
    %v206 = vmax.f32 %v140, %v142
    %v207 = vmax.f32 %v141, %v143
    %v208 = vmax.f32 %v142, %v144
    %v209 = vmax.f32 %v143, %v145
    %v210 = vmax.f32 %v144, %v146
    %v211 = vmax.f32 %v145, %v147
    %v212 = vmax.f32 %v146, %v148
    %v213 = vmax.f32 %v147, %v149
    %v214 = vmax.f32 %v148, %v150
    %v215 = vmax.f32 %v149, %v151
    %v216 = vmax.f32 %v150, %v152
    %v217 = vmax.f32 %v151, %v153
    %v218 = vmax.f32 %v152, %v154
    %v219 = vmax.f32 %v153, %v155
    %v220 = vmax.f32 %v154, %v156
    %v221 = vmax.f32 %v155, %v157
    %v222 = vmax.f32 %v156, %v158
    %v223 = vmax.f32 %v157, %v159
    %v224 = vmax.f32 %v158, %v160
    %v225 = vmax.f32 %v159, %v161
    %v226 = vmax.f32 %v160, %v162
    %v227 = vmax.f32 %v161, %v163
    %v228 = vmax.f32 %v162, %v164
    %v229 = vmax.f32 %v169, 0.0
    %v230 = vmax.f32 %v170, 0.0
    %v231 = vmax.f32 %v169, %v171
    %v232 = vmax.f32 %v170, %v172
    %v233 = vmax.f32 %v171, %v173
    %v234 = vmax.f32 %v172, %v174
    %v235 = vmax.f32 %v173, %v175
    %v236 = vmax.f32 %v174, %v176
    %v237 = vmax.f32 %v175, %v177
    %v238 = vmax.f32 %v176, %v178
    %v239 = vmax.f32 %v177, %v179
    %v240 = vmax.f32 %v178, %v180
    %v241 = vmax.f32 %v179, %v181
    %v242 = vmax.f32 %v180, %v182
    %v243 = vmax.f32 %v181, %v183
    %v244 = vmax.f32 %v182, %v184
    %v245 = vmax.f32 %v183, %v185
    %v246 = vmax.f32 %v184, %v186
    %v247 = vmax.f32 %v185, %v187
    %v248 = vmax.f32 %v186, %v188
    %v249 = vmax.f32 %v187, %v189
    %v250 = vmax.f32 %v188, %v190
    %v251 = vmax.f32 %v189, %v191
    %v252 = vmax.f32 %v190, %v192
    %v253 = vmax.f32 %v191, %v193
    %v254 = vmax.f32 %v192, %v194
    %v255 = vmax.f32 %v193, %v195
    %v256 = vmax.f32 %v194, %v196
    %v257 = vmax.f32 %v201, %v139
    %v258 = vmax.f32 %v202, %v140
    %v259 = vmax.f32 %v203, %v141
    %v260 = vmax.f32 %v204, %v142
    %v261 = vmax.f32 %v205, %v143
    %v262 = vmax.f32 %v206, %v144
    %v263 = vmax.f32 %v207, %v145
    %v264 = vmax.f32 %v208, %v146
    %v265 = vmax.f32 %v209, %v147
    %v266 = vmax.f32 %v210, %v148
    %v267 = vmax.f32 %v211, %v149
    %v268 = vmax.f32 %v212, %v150
    %v269 = vmax.f32 %v213, %v151
    %v270 = vmax.f32 %v214, %v152
    %v271 = vmax.f32 %v215, %v153
    %v272 = vmax.f32 %v216, %v154
    %v273 = vmax.f32 %v217, %v155
    %v274 = vmax.f32 %v218, %v156
    %v275 = vmax.f32 %v219, %v157
    %v276 = vmax.f32 %v220, %v158
    %v277 = vmax.f32 %v221, %v159
    %v278 = vmax.f32 %v222, %v160
    %v279 = vmax.f32 %v223, %v161
    %v280 = vmax.f32 %v224, %v162
    %v281 = vmax.f32 %v225, %v163
    %v282 = vmax.f32 %v226, %v164
    %v283 = vmax.f32 %v227, %v165
    %v284 = vmax.f32 %v228, %v166
    %v285 = vmax.f32 %v229, %v171
    %v286 = vmax.f32 %v230, %v172
    %v287 = vmax.f32 %v231, %v173
    %v288 = vmax.f32 %v232, %v174
    %v289 = vmax.f32 %v233, %v175
    %v290 = vmax.f32 %v234, %v176
    %v291 = vmax.f32 %v235, %v177
    %v292 = vmax.f32 %v236, %v178
    %v293 = vmax.f32 %v237, %v179
    %v294 = vmax.f32 %v238, %v180
    %v295 = vmax.f32 %v239, %v181
    %v296 = vmax.f32 %v240, %v182
    %v297 = vmax.f32 %v241, %v183
    %v298 = vmax.f32 %v242, %v184
    %v299 = vmax.f32 %v243, %v185
    %v300 = vmax.f32 %v244, %v186
    %v301 = vmax.f32 %v245, %v187
    %v302 = vmax.f32 %v246, %v188
    %v303 = vmax.f32 %v247, %v189
    %v304 = vmax.f32 %v248, %v190
    %v305 = vmax.f32 %v249, %v191
    %v306 = vmax.f32 %v250, %v192
    %v307 = vmax.f32 %v251, %v193
    %v308 = vmax.f32 %v252, %v194
    %v309 = vmax.f32 %v253, %v195
    %v310 = vmax.f32 %v254, %v196
    %v311 = vmax.f32 %v255, %v197
    %v312 = vmax.f32 %v256, %v198
    %v313 = vmax.f32 %v257, %v141
    %v314 = vmax.f32 %v258, %v142
    %v315 = vmax.f32 %v259, %v143
    %v316 = vmax.f32 %v260, %v144
    %v317 = vmax.f32 %v261, %v145
    %v318 = vmax.f32 %v262, %v146
    %v319 = vmax.f32 %v263, %v147
    %v320 = vmax.f32 %v264, %v148
    %v321 = vmax.f32 %v265, %v149
    %v322 = vmax.f32 %v266, %v150
    %v323 = vmax.f32 %v267, %v151
    %v324 = vmax.f32 %v268, %v152
    %v325 = vmax.f32 %v269, %v153
    %v326 = vmax.f32 %v270, %v154
    %v327 = vmax.f32 %v271, %v155
    %v328 = vmax.f32 %v272, %v156
    %v329 = vmax.f32 %v273, %v157
    %v330 = vmax.f32 %v274, %v158
    %v331 = vmax.f32 %v275, %v159
    %v332 = vmax.f32 %v276, %v160
    %v333 = vmax.f32 %v277, %v161
    %v334 = vmax.f32 %v278, %v162
    %v335 = vmax.f32 %v279, %v163
    %v336 = vmax.f32 %v280, %v164
    %v337 = vmax.f32 %v281, %v165
    %v338 = vmax.f32 %v282, %v166
    %v339 = vmax.f32 %v283, %v167
    %v340 = vmax.f32 %v284, %v168
    %v341 = vmax.f32 %v285, %v173
    %v342 = vmax.f32 %v286, %v174
    %v343 = vmax.f32 %v287, %v175
    %v344 = vmax.f32 %v288, %v176
    %v345 = vmax.f32 %v289, %v177
    %v346 = vmax.f32 %v290, %v178
    %v347 = vmax.f32 %v291, %v179
    %v348 = vmax.f32 %v292, %v180
    %v349 = vmax.f32 %v293, %v181
    %v350 = vmax.f32 %v294, %v182
    %v351 = vmax.f32 %v295, %v183
    %v352 = vmax.f32 %v296, %v184
    %v353 = vmax.f32 %v297, %v185
    %v354 = vmax.f32 %v298, %v186
    %v355 = vmax.f32 %v299, %v187
    %v356 = vmax.f32 %v300, %v188
    %v357 = vmax.f32 %v301, %v189
    %v358 = vmax.f32 %v302, %v190
    %v359 = vmax.f32 %v303, %v191
    %v360 = vmax.f32 %v304, %v192
    %v361 = vmax.f32 %v305, %v193
    %v362 = vmax.f32 %v306, %v194
    %v363 = vmax.f32 %v307, %v195
    %v364 = vmax.f32 %v308, %v196
    %v365 = vmax.f32 %v309, %v197
    %v366 = vmax.f32 %v310, %v198
    %v367 = vmax.f32 %v311, %v199
    %v368 = vmax.f32 %v312, %v200
    %v369 = vmax.f32 %v313, %v143
    %v370 = vmax.f32 %v314, %v144
    %v371 = vmax.f32 %v315, %v145
    %v372 = vmax.f32 %v316, %v146
    %v373 = vmax.f32 %v317, %v147
    %v374 = vmax.f32 %v318, %v148
    %v375 = vmax.f32 %v319, %v149
    %v376 = vmax.f32 %v320, %v150
    %v377 = vmax.f32 %v321, %v151
    %v378 = vmax.f32 %v322, %v152
    %v379 = vmax.f32 %v323, %v153
    %v380 = vmax.f32 %v324, %v154
    %v381 = vmax.f32 %v325, %v155
    %v382 = vmax.f32 %v326, %v156
    %v383 = vmax.f32 %v327, %v157
    %v384 = vmax.f32 %v328, %v158
    %v385 = vmax.f32 %v329, %v159
    %v386 = vmax.f32 %v330, %v160
    %v387 = vmax.f32 %v331, %v161
    %v388 = vmax.f32 %v332, %v162
    %v389 = vmax.f32 %v333, %v163
    %v390 = vmax.f32 %v334, %v164
    %v391 = vmax.f32 %v335, %v165
    %v392 = vmax.f32 %v336, %v166
    %v393 = vmax.f32 %v337, %v167
    %v394 = vmax.f32 %v338, %v168
    %v395 = vmax.f32 %v339, 0.0
    %v396 = vmax.f32 %v340, 0.0
    %v397 = vmax.f32 %v341, %v175
    %v398 = vmax.f32 %v342, %v176
    %v399 = vmax.f32 %v343, %v177
    %v400 = vmax.f32 %v344, %v178
    %v401 = vmax.f32 %v345, %v179
    %v402 = vmax.f32 %v346, %v180
    %v403 = vmax.f32 %v347, %v181
    %v404 = vmax.f32 %v348, %v182
    %v405 = vmax.f32 %v349, %v183
    %v406 = vmax.f32 %v350, %v184
    %v407 = vmax.f32 %v351, %v185
    %v408 = vmax.f32 %v352, %v186
    %v409 = vmax.f32 %v353, %v187
    %v410 = vmax.f32 %v354, %v188
    %v411 = vmax.f32 %v355, %v189
    %v412 = vmax.f32 %v356, %v190
    %v413 = vmax.f32 %v357, %v191
    %v414 = vmax.f32 %v358, %v192
    %v415 = vmax.f32 %v359, %v193
    %v416 = vmax.f32 %v360, %v194
    %v417 = vmax.f32 %v361, %v195
    %v418 = vmax.f32 %v362, %v196
    %v419 = vmax.f32 %v363, %v197
    %v420 = vmax.f32 %v364, %v198
    %v421 = vmax.f32 %v365, %v199
    %v422 = vmax.f32 %v366, %v200
    %v423 = vmax.f32 %v367, 0.0
    %v424 = vmax.f32 %v368, 0.0
    %v425 = vmax.f32 %v369, %v145
    %v426 = vmax.f32 %v370, %v146
    %v427 = vmax.f32 %v371, %v147
    %v428 = vmax.f32 %v372, %v148
    %v429 = vmax.f32 %v373, %v149
    %v430 = vmax.f32 %v374, %v150
    %v431 = vmax.f32 %v375, %v151
    %v432 = vmax.f32 %v376, %v152
    %v433 = vmax.f32 %v377, %v153
    %v434 = vmax.f32 %v378, %v154
    %v435 = vmax.f32 %v379, %v155
    %v436 = vmax.f32 %v380, %v156
    %v437 = vmax.f32 %v381, %v157
    %v438 = vmax.f32 %v382, %v158
    %v439 = vmax.f32 %v383, %v159
    %v440 = vmax.f32 %v384, %v160
    %v441 = vmax.f32 %v385, %v161
    %v442 = vmax.f32 %v386, %v162
    %v443 = vmax.f32 %v387, %v163
    %v444 = vmax.f32 %v388, %v164
    %v445 = vmax.f32 %v389, %v165
    %v446 = vmax.f32 %v390, %v166
    %v447 = vmax.f32 %v391, %v167
    %v448 = vmax.f32 %v392, %v168
    %v449 = vmax.f32 %v393, 0.0
    %v450 = vmax.f32 %v394, 0.0
    %v451 = vmax.f32 %v395, 0.0
    %v452 = vmax.f32 %v396, 0.0
    %v453 = vmax.f32 %v397, %v177
    %v454 = vmax.f32 %v398, %v178
    %v455 = vmax.f32 %v399, %v179
    %v456 = vmax.f32 %v400, %v180
    %v457 = vmax.f32 %v401, %v181
    %v458 = vmax.f32 %v402, %v182
    %v459 = vmax.f32 %v403, %v183
    %v460 = vmax.f32 %v404, %v184
    %v461 = vmax.f32 %v405, %v185
    %v462 = vmax.f32 %v406, %v186
    %v463 = vmax.f32 %v407, %v187
    %v464 = vmax.f32 %v408, %v188
    %v465 = vmax.f32 %v409, %v189
    %v466 = vmax.f32 %v410, %v190
    %v467 = vmax.f32 %v411, %v191
    %v468 = vmax.f32 %v412, %v192
    %v469 = vmax.f32 %v413, %v193
    %v470 = vmax.f32 %v414, %v194
    %v471 = vmax.f32 %v415, %v195
    %v472 = vmax.f32 %v416, %v196
    %v473 = vmax.f32 %v417, %v197
    %v474 = vmax.f32 %v418, %v198
    %v475 = vmax.f32 %v419, %v199
    %v476 = vmax.f32 %v420, %v200
    %v477 = vmax.f32 %v421, 0.0
    %v478 = vmax.f32 %v422, 0.0
    %v479 = vmax.f32 %v423, 0.0
    %v480 = vmax.f32 %v424, 0.0
    %v481 = vmax.f32 %v425, %v147
    %v482 = vmax.f32 %v426, %v148
    %v483 = vmax.f32 %v427, %v149
    %v484 = vmax.f32 %v428, %v150
    %v485 = vmax.f32 %v429, %v151
    %v486 = vmax.f32 %v430, %v152
    %v487 = vmax.f32 %v431, %v153
    %v488 = vmax.f32 %v432, %v154
    %v489 = vmax.f32 %v433, %v155
    %v490 = vmax.f32 %v434, %v156
    %v491 = vmax.f32 %v435, %v157
    %v492 = vmax.f32 %v436, %v158
    %v493 = vmax.f32 %v437, %v159
    %v494 = vmax.f32 %v438, %v160
    %v495 = vmax.f32 %v439, %v161
    %v496 = vmax.f32 %v440, %v162
    %v497 = vmax.f32 %v441, %v163
    %v498 = vmax.f32 %v442, %v164
    %v499 = vmax.f32 %v443, %v165
    %v500 = vmax.f32 %v444, %v166
    %v501 = vmax.f32 %v445, %v167
    %v502 = vmax.f32 %v446, %v168
    %v503 = vmax.f32 %v447, 0.0
    %v504 = vmax.f32 %v448, 0.0
    %v505 = vmax.f32 %v449, 0.0
    %v506 = vmax.f32 %v450, 0.0
    %v507 = vmax.f32 %v451, 0.0
    %v508 = vmax.f32 %v452, 0.0
    %v509 = vmax.f32 %v453, %v179
    %v510 = vmax.f32 %v454, %v180
    %v511 = vmax.f32 %v455, %v181
    %v512 = vmax.f32 %v456, %v182
    %v513 = vmax.f32 %v457, %v183
    %v514 = vmax.f32 %v458, %v184
    %v515 = vmax.f32 %v459, %v185
    %v516 = vmax.f32 %v460, %v186
    %v517 = vmax.f32 %v461, %v187
    %v518 = vmax.f32 %v462, %v188
    %v519 = vmax.f32 %v463, %v189
    %v520 = vmax.f32 %v464, %v190
    %v521 = vmax.f32 %v465, %v191
    %v522 = vmax.f32 %v466, %v192
    %v523 = vmax.f32 %v467, %v193
    %v524 = vmax.f32 %v468, %v194
    %v525 = vmax.f32 %v469, %v195
    %v526 = vmax.f32 %v470, %v196
    %v527 = vmax.f32 %v471, %v197
    %v528 = vmax.f32 %v472, %v198
    %v529 = vmax.f32 %v473, %v199
    %v530 = vmax.f32 %v474, %v200
    %v531 = vmax.f32 %v475, 0.0
    %v532 = vmax.f32 %v476, 0.0
    %v533 = vmax.f32 %v477, 0.0
    %v534 = vmax.f32 %v478, 0.0
    %v535 = vmax.f32 %v479, 0.0
    %v536 = vmax.f32 %v480, 0.0
    %vm601 = vcmask 1042432
    %v602 = vrot.slane %v369, 5
    %v603 = vrot.slane %v370, 5
    %v604 = vsel %vm601, %v602, %v603
    %v605 = vrot.slane %v425, 5
    %v606 = vrot.slane %v426, 5
    %v607 = vsel %vm601, %v605, %v606
    %v608 = vrot.slane %v481, 5
    %v609 = vrot.slane %v482, 5
    %v610 = vsel %vm601, %v608, %v609
    %v611 = vrot.slane %v483, 5
    %v612 = vrot.slane %v484, 5
    %v613 = vsel %vm601, %v611, %v612
    %v614 = vrot.slane %v485, 5
    %v615 = vrot.slane %v486, 5
    %v616 = vsel %vm601, %v614, %v615
    %v617 = vrot.slane %v487, 5
    %v618 = vrot.slane %v488, 5
    %v619 = vsel %vm601, %v617, %v618
    %v620 = vrot.slane %v489, 5
    %v621 = vrot.slane %v490, 5
    %v622 = vsel %vm601, %v620, %v621
    %v623 = vrot.slane %v491, 5
    %v624 = vrot.slane %v492, 5
    %v625 = vsel %vm601, %v623, %v624
    %v626 = vrot.slane %v493, 5
    %v627 = vrot.slane %v494, 5
    %v628 = vsel %vm601, %v626, %v627
    %v629 = vrot.slane %v495, 5
    %v630 = vrot.slane %v496, 5
    %v631 = vsel %vm601, %v629, %v630
    %v632 = vrot.slane %v497, 5
    %v633 = vrot.slane %v498, 5
    %v634 = vsel %vm601, %v632, %v633
    %v635 = vrot.slane %v499, 5
    %v636 = vrot.slane %v500, 5
    %v637 = vsel %vm601, %v635, %v636
    %v638 = vrot.slane %v501, 5
    %v639 = vrot.slane %v502, 5
    %v640 = vsel %vm601, %v638, %v639
    %v641 = vrot.slane %v503, 5
    %v642 = vrot.slane %v504, 5
    %v643 = vsel %vm601, %v641, %v642
    %v644 = vrot.slane %v505, 5
    %v645 = vrot.slane %v506, 5
    %v646 = vsel %vm601, %v644, %v645
    %v647 = vrot.slane %v507, 5
    %v648 = vrot.slane %v508, 5
    %v649 = vsel %vm601, %v647, %v648
    %v650 = vrot.slane %v397, 5
    %v651 = vrot.slane %v398, 5
    %v652 = vsel %vm601, %v650, %v651
    %v653 = vrot.slane %v453, 5
    %v654 = vrot.slane %v454, 5
    %v655 = vsel %vm601, %v653, %v654
    %v656 = vrot.slane %v509, 5
    %v657 = vrot.slane %v510, 5
    %v658 = vsel %vm601, %v656, %v657
    %v659 = vrot.slane %v511, 5
    %v660 = vrot.slane %v512, 5
    %v661 = vsel %vm601, %v659, %v660
    %v662 = vrot.slane %v513, 5
    %v663 = vrot.slane %v514, 5
    %v664 = vsel %vm601, %v662, %v663
    %v665 = vrot.slane %v515, 5
    %v666 = vrot.slane %v516, 5
    %v667 = vsel %vm601, %v665, %v666
    %v668 = vrot.slane %v517, 5
    %v669 = vrot.slane %v518, 5
    %v670 = vsel %vm601, %v668, %v669
    %v671 = vrot.slane %v519, 5
    %v672 = vrot.slane %v520, 5
    %v673 = vsel %vm601, %v671, %v672
    %v674 = vrot.slane %v521, 5
    %v675 = vrot.slane %v522, 5
    %v676 = vsel %vm601, %v674, %v675
    %v677 = vrot.slane %v523, 5
    %v678 = vrot.slane %v524, 5
    %v679 = vsel %vm601, %v677, %v678
    %v680 = vrot.slane %v525, 5
    %v681 = vrot.slane %v526, 5
    %v682 = vsel %vm601, %v680, %v681
    %v683 = vrot.slane %v527, 5
    %v684 = vrot.slane %v528, 5
    %v685 = vsel %vm601, %v683, %v684
    %v686 = vrot.slane %v529, 5
    %v687 = vrot.slane %v530, 5
    %v688 = vsel %vm601, %v686, %v687
    %v689 = vrot.slane %v531, 5
    %v690 = vrot.slane %v532, 5
    %v691 = vsel %vm601, %v689, %v690
    %v692 = vrot.slane %v533, 5
    %v693 = vrot.slane %v534, 5
    %v694 = vsel %vm601, %v692, %v693
    %v695 = vrot.slane %v535, 5
    %v696 = vrot.slane %v536, 5
    %v697 = vsel %vm601, %v695, %v696
    %v794 = vsel %vm601, 0.0, %v602
    %v795 = vsel %vm601, 0.0, %v605
    %v796 = vsel %vm601, 0.0, %v608
    %v797 = vsel %vm601, 0.0, %v611
    %v798 = vsel %vm601, 0.0, %v614
    %v799 = vsel %vm601, 0.0, %v617
    %v800 = vsel %vm601, 0.0, %v620
    %v801 = vsel %vm601, 0.0, %v623
    %v802 = vsel %vm601, 0.0, %v626
    %v803 = vsel %vm601, 0.0, %v629
    %v804 = vsel %vm601, 0.0, %v632
    %v805 = vsel %vm601, 0.0, %v635
    %v806 = vsel %vm601, 0.0, %v638
    %v807 = vsel %vm601, 0.0, %v641
    %v808 = vsel %vm601, 0.0, %v644
    %v809 = vsel %vm601, 0.0, %v647
    %v810 = vsel %vm601, 0.0, %v650
    %v811 = vsel %vm601, 0.0, %v653
    %v812 = vsel %vm601, 0.0, %v656
    %v813 = vsel %vm601, 0.0, %v659
    %v814 = vsel %vm601, 0.0, %v662
    %v815 = vsel %vm601, 0.0, %v665
    %v816 = vsel %vm601, 0.0, %v668
    %v817 = vsel %vm601, 0.0, %v671
    %v818 = vsel %vm601, 0.0, %v674
    %v819 = vsel %vm601, 0.0, %v677
    %v820 = vsel %vm601, 0.0, %v680
    %v821 = vsel %vm601, 0.0, %v683
    %v822 = vsel %vm601, 0.0, %v686
    %v823 = vsel %vm601, 0.0, %v689
    %v824 = vsel %vm601, 0.0, %v692
    %v825 = vsel %vm601, 0.0, %v695
    %v826 = vsel %vm601, %v603, 0.0
    %v827 = vsel %vm601, %v606, 0.0
    %v828 = vsel %vm601, %v609, 0.0
    %v829 = vsel %vm601, %v612, 0.0
    %v830 = vsel %vm601, %v615, 0.0
    %v831 = vsel %vm601, %v618, 0.0
    %v832 = vsel %vm601, %v621, 0.0
    %v833 = vsel %vm601, %v624, 0.0
    %v834 = vsel %vm601, %v627, 0.0
    %v835 = vsel %vm601, %v630, 0.0
    %v836 = vsel %vm601, %v633, 0.0
    %v837 = vsel %vm601, %v636, 0.0
    %v838 = vsel %vm601, %v639, 0.0
    %v839 = vsel %vm601, %v642, 0.0
    %v840 = vsel %vm601, %v645, 0.0
    %v841 = vsel %vm601, %v648, 0.0
    %v842 = vsel %vm601, %v651, 0.0
    %v843 = vsel %vm601, %v654, 0.0
    %v844 = vsel %vm601, %v657, 0.0
    %v845 = vsel %vm601, %v660, 0.0
    %v846 = vsel %vm601, %v663, 0.0
    %v847 = vsel %vm601, %v666, 0.0
    %v848 = vsel %vm601, %v669, 0.0
    %v849 = vsel %vm601, %v672, 0.0
    %v850 = vsel %vm601, %v675, 0.0
    %v851 = vsel %vm601, %v678, 0.0
    %v852 = vsel %vm601, %v681, 0.0
    %v853 = vsel %vm601, %v684, 0.0
    %v854 = vsel %vm601, %v687, 0.0
    %v855 = vsel %vm601, %v690, 0.0
    %v856 = vsel %vm601, %v693, 0.0
    %v857 = vsel %vm601, %v696, 0.0
    %vm922 = vcmask 1046528
    %v923 = vrot.slane %v794, 1
    %v924 = vrot.slane %v604, 1
    %v925 = vsel %vm922, %v923, %v924
    %v926 = vrot.slane %v826, 1
    %v927 = vsel %vm922, %v924, %v926
    %v928 = vrot.slane %v795, 1
    %v929 = vrot.slane %v607, 1
    %v930 = vsel %vm922, %v928, %v929
    %v931 = vrot.slane %v827, 1
    %v932 = vsel %vm922, %v929, %v931
    %v933 = vrot.slane %v796, 1
    %v934 = vrot.slane %v610, 1
    %v935 = vsel %vm922, %v933, %v934
    %v936 = vrot.slane %v828, 1
    %v937 = vsel %vm922, %v934, %v936
    %v938 = vrot.slane %v797, 1
    %v939 = vrot.slane %v613, 1
    %v940 = vsel %vm922, %v938, %v939
    %v941 = vrot.slane %v829, 1
    %v942 = vsel %vm922, %v939, %v941
    %v943 = vrot.slane %v798, 1
    %v944 = vrot.slane %v616, 1
    %v945 = vsel %vm922, %v943, %v944
    %v946 = vrot.slane %v830, 1
    %v947 = vsel %vm922, %v944, %v946
    %v948 = vrot.slane %v799, 1
    %v949 = vrot.slane %v619, 1
    %v950 = vsel %vm922, %v948, %v949
    %v951 = vrot.slane %v831, 1
    %v952 = vsel %vm922, %v949, %v951
    %v953 = vrot.slane %v800, 1
    %v954 = vrot.slane %v622, 1
    %v955 = vsel %vm922, %v953, %v954
    %v956 = vrot.slane %v832, 1
    %v957 = vsel %vm922, %v954, %v956
    %v958 = vrot.slane %v801, 1
    %v959 = vrot.slane %v625, 1
    %v960 = vsel %vm922, %v958, %v959
    %v961 = vrot.slane %v833, 1
    %v962 = vsel %vm922, %v959, %v961
    %v963 = vrot.slane %v802, 1
    %v964 = vrot.slane %v628, 1
    %v965 = vsel %vm922, %v963, %v964
    %v966 = vrot.slane %v834, 1
    %v967 = vsel %vm922, %v964, %v966
    %v968 = vrot.slane %v803, 1
    %v969 = vrot.slane %v631, 1
    %v970 = vsel %vm922, %v968, %v969
    %v971 = vrot.slane %v835, 1
    %v972 = vsel %vm922, %v969, %v971
    %v973 = vrot.slane %v804, 1
    %v974 = vrot.slane %v634, 1
    %v975 = vsel %vm922, %v973, %v974
    %v976 = vrot.slane %v836, 1
    %v977 = vsel %vm922, %v974, %v976
    %v978 = vrot.slane %v805, 1
    %v979 = vrot.slane %v637, 1
    %v980 = vsel %vm922, %v978, %v979
    %v981 = vrot.slane %v837, 1
    %v982 = vsel %vm922, %v979, %v981
    %v983 = vrot.slane %v806, 1
    %v984 = vrot.slane %v640, 1
    %v985 = vsel %vm922, %v983, %v984
    %v986 = vrot.slane %v838, 1
    %v987 = vsel %vm922, %v984, %v986
    %v988 = vrot.slane %v807, 1
    %v989 = vrot.slane %v643, 1
    %v990 = vsel %vm922, %v988, %v989
    %v991 = vrot.slane %v839, 1
    %v992 = vsel %vm922, %v989, %v991
    %v993 = vrot.slane %v808, 1
    %v994 = vrot.slane %v646, 1
    %v995 = vsel %vm922, %v993, %v994
    %v996 = vrot.slane %v840, 1
    %v997 = vsel %vm922, %v994, %v996
    %v998 = vrot.slane %v809, 1
    %v999 = vrot.slane %v649, 1
    %v1000 = vsel %vm922, %v998, %v999
    %v1001 = vrot.slane %v841, 1
    %v1002 = vsel %vm922, %v999, %v1001
    %v1003 = vrot.slane %v810, 1
    %v1004 = vrot.slane %v652, 1
    %v1005 = vsel %vm922, %v1003, %v1004
    %v1006 = vrot.slane %v842, 1
    %v1007 = vsel %vm922, %v1004, %v1006
    %v1008 = vrot.slane %v811, 1
    %v1009 = vrot.slane %v655, 1
    %v1010 = vsel %vm922, %v1008, %v1009
    %v1011 = vrot.slane %v843, 1
    %v1012 = vsel %vm922, %v1009, %v1011
    %v1013 = vrot.slane %v812, 1
    %v1014 = vrot.slane %v658, 1
    %v1015 = vsel %vm922, %v1013, %v1014
    %v1016 = vrot.slane %v844, 1
    %v1017 = vsel %vm922, %v1014, %v1016
    %v1018 = vrot.slane %v813, 1
    %v1019 = vrot.slane %v661, 1
    %v1020 = vsel %vm922, %v1018, %v1019
    %v1021 = vrot.slane %v845, 1
    %v1022 = vsel %vm922, %v1019, %v1021
    %v1023 = vrot.slane %v814, 1
    %v1024 = vrot.slane %v664, 1
    %v1025 = vsel %vm922, %v1023, %v1024
    %v1026 = vrot.slane %v846, 1
    %v1027 = vsel %vm922, %v1024, %v1026
    %v1028 = vrot.slane %v815, 1
    %v1029 = vrot.slane %v667, 1
    %v1030 = vsel %vm922, %v1028, %v1029
    %v1031 = vrot.slane %v847, 1
    %v1032 = vsel %vm922, %v1029, %v1031
    %v1033 = vrot.slane %v816, 1
    %v1034 = vrot.slane %v670, 1
    %v1035 = vsel %vm922, %v1033, %v1034
    %v1036 = vrot.slane %v848, 1
    %v1037 = vsel %vm922, %v1034, %v1036
    %v1038 = vrot.slane %v817, 1
    %v1039 = vrot.slane %v673, 1
    %v1040 = vsel %vm922, %v1038, %v1039
    %v1041 = vrot.slane %v849, 1
    %v1042 = vsel %vm922, %v1039, %v1041
    %v1043 = vrot.slane %v818, 1
    %v1044 = vrot.slane %v676, 1
    %v1045 = vsel %vm922, %v1043, %v1044
    %v1046 = vrot.slane %v850, 1
    %v1047 = vsel %vm922, %v1044, %v1046
    %v1048 = vrot.slane %v819, 1
    %v1049 = vrot.slane %v679, 1
    %v1050 = vsel %vm922, %v1048, %v1049
    %v1051 = vrot.slane %v851, 1
    %v1052 = vsel %vm922, %v1049, %v1051
    %v1053 = vrot.slane %v820, 1
    %v1054 = vrot.slane %v682, 1
    %v1055 = vsel %vm922, %v1053, %v1054
    %v1056 = vrot.slane %v852, 1
    %v1057 = vsel %vm922, %v1054, %v1056
    %v1058 = vrot.slane %v821, 1
    %v1059 = vrot.slane %v685, 1
    %v1060 = vsel %vm922, %v1058, %v1059
    %v1061 = vrot.slane %v853, 1
    %v1062 = vsel %vm922, %v1059, %v1061
    %v1063 = vrot.slane %v822, 1
    %v1064 = vrot.slane %v688, 1
    %v1065 = vsel %vm922, %v1063, %v1064
    %v1066 = vrot.slane %v854, 1
    %v1067 = vsel %vm922, %v1064, %v1066
    %v1068 = vrot.slane %v823, 1
    %v1069 = vrot.slane %v691, 1
    %v1070 = vsel %vm922, %v1068, %v1069
    %v1071 = vrot.slane %v855, 1
    %v1072 = vsel %vm922, %v1069, %v1071
    %v1073 = vrot.slane %v824, 1
    %v1074 = vrot.slane %v694, 1
    %v1075 = vsel %vm922, %v1073, %v1074
    %v1076 = vrot.slane %v856, 1
    %v1077 = vsel %vm922, %v1074, %v1076
    %v1078 = vrot.slane %v825, 1
    %v1079 = vrot.slane %v697, 1
    %v1080 = vsel %vm922, %v1078, %v1079
    %v1081 = vrot.slane %v857, 1
    %v1082 = vsel %vm922, %v1079, %v1081
    %v1147 = vmax.f32 %v794, %v925
    %v1148 = vmax.f32 %v604, %v927
    %v1149 = vmax.f32 %v795, %v930
    %v1150 = vmax.f32 %v607, %v932
    %v1151 = vmax.f32 %v796, %v935
    %v1152 = vmax.f32 %v610, %v937
    %v1153 = vmax.f32 %v797, %v940
    %v1154 = vmax.f32 %v613, %v942
    %v1155 = vmax.f32 %v798, %v945
    %v1156 = vmax.f32 %v616, %v947
    %v1157 = vmax.f32 %v799, %v950
    %v1158 = vmax.f32 %v619, %v952
    %v1159 = vmax.f32 %v800, %v955
    %v1160 = vmax.f32 %v622, %v957
    %v1161 = vmax.f32 %v801, %v960
    %v1162 = vmax.f32 %v625, %v962
    %v1163 = vmax.f32 %v802, %v965
    %v1164 = vmax.f32 %v628, %v967
    %v1165 = vmax.f32 %v803, %v970
    %v1166 = vmax.f32 %v631, %v972
    %v1167 = vmax.f32 %v804, %v975
    %v1168 = vmax.f32 %v634, %v977
    %v1169 = vmax.f32 %v805, %v980
    %v1170 = vmax.f32 %v637, %v982
    %v1171 = vmax.f32 %v806, %v985
    %v1172 = vmax.f32 %v640, %v987
    %v1173 = vmax.f32 %v807, %v990
    %v1174 = vmax.f32 %v643, %v992
    %v1175 = vmax.f32 %v808, %v995
    %v1176 = vmax.f32 %v646, %v997
    %v1177 = vmax.f32 %v809, %v1000
    %v1178 = vmax.f32 %v649, %v1002
    %v1179 = vmax.f32 %v810, %v1005
    %v1180 = vmax.f32 %v652, %v1007
    %v1181 = vmax.f32 %v811, %v1010
    %v1182 = vmax.f32 %v655, %v1012
    %v1183 = vmax.f32 %v812, %v1015
    %v1184 = vmax.f32 %v658, %v1017
    %v1185 = vmax.f32 %v813, %v1020
    %v1186 = vmax.f32 %v661, %v1022
    %v1187 = vmax.f32 %v814, %v1025
    %v1188 = vmax.f32 %v664, %v1027
    %v1189 = vmax.f32 %v815, %v1030
    %v1190 = vmax.f32 %v667, %v1032
    %v1191 = vmax.f32 %v816, %v1035
    %v1192 = vmax.f32 %v670, %v1037
    %v1193 = vmax.f32 %v817, %v1040
    %v1194 = vmax.f32 %v673, %v1042
    %v1195 = vmax.f32 %v818, %v1045
    %v1196 = vmax.f32 %v676, %v1047
    %v1197 = vmax.f32 %v819, %v1050
    %v1198 = vmax.f32 %v679, %v1052
    %v1199 = vmax.f32 %v820, %v1055
    %v1200 = vmax.f32 %v682, %v1057
    %v1201 = vmax.f32 %v821, %v1060
    %v1202 = vmax.f32 %v685, %v1062
    %v1203 = vmax.f32 %v822, %v1065
    %v1204 = vmax.f32 %v688, %v1067
    %v1205 = vmax.f32 %v823, %v1070
    %v1206 = vmax.f32 %v691, %v1072
    %v1207 = vmax.f32 %v824, %v1075
    %v1208 = vmax.f32 %v694, %v1077
    %v1209 = vmax.f32 %v825, %v1080
    %v1210 = vmax.f32 %v697, %v1082
    %vm1211 = vcmask 1045504
    %v1212 = vrot.slane %v794, 2
    %v1213 = vrot.slane %v604, 2
    %v1214 = vsel %vm1211, %v1212, %v1213
    %v1215 = vrot.slane %v826, 2
    %v1216 = vsel %vm1211, %v1213, %v1215
    %v1217 = vrot.slane %v795, 2
    %v1218 = vrot.slane %v607, 2
    %v1219 = vsel %vm1211, %v1217, %v1218
    %v1220 = vrot.slane %v827, 2
    %v1221 = vsel %vm1211, %v1218, %v1220
    %v1222 = vrot.slane %v796, 2
    %v1223 = vrot.slane %v610, 2
    %v1224 = vsel %vm1211, %v1222, %v1223
    %v1225 = vrot.slane %v828, 2
    %v1226 = vsel %vm1211, %v1223, %v1225
    %v1227 = vrot.slane %v797, 2
    %v1228 = vrot.slane %v613, 2
    %v1229 = vsel %vm1211, %v1227, %v1228
    %v1230 = vrot.slane %v829, 2
    %v1231 = vsel %vm1211, %v1228, %v1230
    %v1232 = vrot.slane %v798, 2
    %v1233 = vrot.slane %v616, 2
    %v1234 = vsel %vm1211, %v1232, %v1233
    %v1235 = vrot.slane %v830, 2
    %v1236 = vsel %vm1211, %v1233, %v1235
    %v1237 = vrot.slane %v799, 2
    %v1238 = vrot.slane %v619, 2
    %v1239 = vsel %vm1211, %v1237, %v1238
    %v1240 = vrot.slane %v831, 2
    %v1241 = vsel %vm1211, %v1238, %v1240
    %v1242 = vrot.slane %v800, 2
    %v1243 = vrot.slane %v622, 2
    %v1244 = vsel %vm1211, %v1242, %v1243
    %v1245 = vrot.slane %v832, 2
    %v1246 = vsel %vm1211, %v1243, %v1245
    %v1247 = vrot.slane %v801, 2
    %v1248 = vrot.slane %v625, 2
    %v1249 = vsel %vm1211, %v1247, %v1248
    %v1250 = vrot.slane %v833, 2
    %v1251 = vsel %vm1211, %v1248, %v1250
    %v1252 = vrot.slane %v802, 2
    %v1253 = vrot.slane %v628, 2
    %v1254 = vsel %vm1211, %v1252, %v1253
    %v1255 = vrot.slane %v834, 2
    %v1256 = vsel %vm1211, %v1253, %v1255
    %v1257 = vrot.slane %v803, 2
    %v1258 = vrot.slane %v631, 2
    %v1259 = vsel %vm1211, %v1257, %v1258
    %v1260 = vrot.slane %v835, 2
    %v1261 = vsel %vm1211, %v1258, %v1260
    %v1262 = vrot.slane %v804, 2
    %v1263 = vrot.slane %v634, 2
    %v1264 = vsel %vm1211, %v1262, %v1263
    %v1265 = vrot.slane %v836, 2
    %v1266 = vsel %vm1211, %v1263, %v1265
    %v1267 = vrot.slane %v805, 2
    %v1268 = vrot.slane %v637, 2
    %v1269 = vsel %vm1211, %v1267, %v1268
    %v1270 = vrot.slane %v837, 2
    %v1271 = vsel %vm1211, %v1268, %v1270
    %v1272 = vrot.slane %v806, 2
    %v1273 = vrot.slane %v640, 2
    %v1274 = vsel %vm1211, %v1272, %v1273
    %v1275 = vrot.slane %v838, 2
    %v1276 = vsel %vm1211, %v1273, %v1275
    %v1277 = vrot.slane %v807, 2
    %v1278 = vrot.slane %v643, 2
    %v1279 = vsel %vm1211, %v1277, %v1278
    %v1280 = vrot.slane %v839, 2
    %v1281 = vsel %vm1211, %v1278, %v1280
    %v1282 = vrot.slane %v808, 2
    %v1283 = vrot.slane %v646, 2
    %v1284 = vsel %vm1211, %v1282, %v1283
    %v1285 = vrot.slane %v840, 2
    %v1286 = vsel %vm1211, %v1283, %v1285
    %v1287 = vrot.slane %v809, 2
    %v1288 = vrot.slane %v649, 2
    %v1289 = vsel %vm1211, %v1287, %v1288
    %v1290 = vrot.slane %v841, 2
    %v1291 = vsel %vm1211, %v1288, %v1290
    %v1292 = vrot.slane %v810, 2
    %v1293 = vrot.slane %v652, 2
    %v1294 = vsel %vm1211, %v1292, %v1293
    %v1295 = vrot.slane %v842, 2
    %v1296 = vsel %vm1211, %v1293, %v1295
    %v1297 = vrot.slane %v811, 2
    %v1298 = vrot.slane %v655, 2
    %v1299 = vsel %vm1211, %v1297, %v1298
    %v1300 = vrot.slane %v843, 2
    %v1301 = vsel %vm1211, %v1298, %v1300
    %v1302 = vrot.slane %v812, 2
    %v1303 = vrot.slane %v658, 2
    %v1304 = vsel %vm1211, %v1302, %v1303
    %v1305 = vrot.slane %v844, 2
    %v1306 = vsel %vm1211, %v1303, %v1305
    %v1307 = vrot.slane %v813, 2
    %v1308 = vrot.slane %v661, 2
    %v1309 = vsel %vm1211, %v1307, %v1308
    %v1310 = vrot.slane %v845, 2
    %v1311 = vsel %vm1211, %v1308, %v1310
    %v1312 = vrot.slane %v814, 2
    %v1313 = vrot.slane %v664, 2
    %v1314 = vsel %vm1211, %v1312, %v1313
    %v1315 = vrot.slane %v846, 2
    %v1316 = vsel %vm1211, %v1313, %v1315
    %v1317 = vrot.slane %v815, 2
    %v1318 = vrot.slane %v667, 2
    %v1319 = vsel %vm1211, %v1317, %v1318
    %v1320 = vrot.slane %v847, 2
    %v1321 = vsel %vm1211, %v1318, %v1320
    %v1322 = vrot.slane %v816, 2
    %v1323 = vrot.slane %v670, 2
    %v1324 = vsel %vm1211, %v1322, %v1323
    %v1325 = vrot.slane %v848, 2
    %v1326 = vsel %vm1211, %v1323, %v1325
    %v1327 = vrot.slane %v817, 2
    %v1328 = vrot.slane %v673, 2
    %v1329 = vsel %vm1211, %v1327, %v1328
    %v1330 = vrot.slane %v849, 2
    %v1331 = vsel %vm1211, %v1328, %v1330
    %v1332 = vrot.slane %v818, 2
    %v1333 = vrot.slane %v676, 2
    %v1334 = vsel %vm1211, %v1332, %v1333
    %v1335 = vrot.slane %v850, 2
    %v1336 = vsel %vm1211, %v1333, %v1335
    %v1337 = vrot.slane %v819, 2
    %v1338 = vrot.slane %v679, 2
    %v1339 = vsel %vm1211, %v1337, %v1338
    %v1340 = vrot.slane %v851, 2
    %v1341 = vsel %vm1211, %v1338, %v1340
    %v1342 = vrot.slane %v820, 2
    %v1343 = vrot.slane %v682, 2
    %v1344 = vsel %vm1211, %v1342, %v1343
    %v1345 = vrot.slane %v852, 2
    %v1346 = vsel %vm1211, %v1343, %v1345
    %v1347 = vrot.slane %v821, 2
    %v1348 = vrot.slane %v685, 2
    %v1349 = vsel %vm1211, %v1347, %v1348
    %v1350 = vrot.slane %v853, 2
    %v1351 = vsel %vm1211, %v1348, %v1350
    %v1352 = vrot.slane %v822, 2
    %v1353 = vrot.slane %v688, 2
    %v1354 = vsel %vm1211, %v1352, %v1353
    %v1355 = vrot.slane %v854, 2
    %v1356 = vsel %vm1211, %v1353, %v1355
    %v1357 = vrot.slane %v823, 2
    %v1358 = vrot.slane %v691, 2
    %v1359 = vsel %vm1211, %v1357, %v1358
    %v1360 = vrot.slane %v855, 2
    %v1361 = vsel %vm1211, %v1358, %v1360
    %v1362 = vrot.slane %v824, 2
    %v1363 = vrot.slane %v694, 2
    %v1364 = vsel %vm1211, %v1362, %v1363
    %v1365 = vrot.slane %v856, 2
    %v1366 = vsel %vm1211, %v1363, %v1365
    %v1367 = vrot.slane %v825, 2
    %v1368 = vrot.slane %v697, 2
    %v1369 = vsel %vm1211, %v1367, %v1368
    %v1370 = vrot.slane %v857, 2
    %v1371 = vsel %vm1211, %v1368, %v1370
    %v1436 = vmax.f32 %v1147, %v1214
    %v1437 = vmax.f32 %v1148, %v1216
    %v1438 = vmax.f32 %v1149, %v1219
    %v1439 = vmax.f32 %v1150, %v1221
    %v1440 = vmax.f32 %v1151, %v1224
    %v1441 = vmax.f32 %v1152, %v1226
    %v1442 = vmax.f32 %v1153, %v1229
    %v1443 = vmax.f32 %v1154, %v1231
    %v1444 = vmax.f32 %v1155, %v1234
    %v1445 = vmax.f32 %v1156, %v1236
    %v1446 = vmax.f32 %v1157, %v1239
    %v1447 = vmax.f32 %v1158, %v1241
    %v1448 = vmax.f32 %v1159, %v1244
    %v1449 = vmax.f32 %v1160, %v1246
    %v1450 = vmax.f32 %v1161, %v1249
    %v1451 = vmax.f32 %v1162, %v1251
    %v1452 = vmax.f32 %v1163, %v1254
    %v1453 = vmax.f32 %v1164, %v1256
    %v1454 = vmax.f32 %v1165, %v1259
    %v1455 = vmax.f32 %v1166, %v1261
    %v1456 = vmax.f32 %v1167, %v1264
    %v1457 = vmax.f32 %v1168, %v1266
    %v1458 = vmax.f32 %v1169, %v1269
    %v1459 = vmax.f32 %v1170, %v1271
    %v1460 = vmax.f32 %v1171, %v1274
    %v1461 = vmax.f32 %v1172, %v1276
    %v1462 = vmax.f32 %v1173, %v1279
    %v1463 = vmax.f32 %v1174, %v1281
    %v1464 = vmax.f32 %v1175, %v1284
    %v1465 = vmax.f32 %v1176, %v1286
    %v1466 = vmax.f32 %v1177, %v1289
    %v1467 = vmax.f32 %v1178, %v1291
    %v1468 = vmax.f32 %v1179, %v1294
    %v1469 = vmax.f32 %v1180, %v1296
    %v1470 = vmax.f32 %v1181, %v1299
    %v1471 = vmax.f32 %v1182, %v1301
    %v1472 = vmax.f32 %v1183, %v1304
    %v1473 = vmax.f32 %v1184, %v1306
    %v1474 = vmax.f32 %v1185, %v1309
    %v1475 = vmax.f32 %v1186, %v1311
    %v1476 = vmax.f32 %v1187, %v1314
    %v1477 = vmax.f32 %v1188, %v1316
    %v1478 = vmax.f32 %v1189, %v1319
    %v1479 = vmax.f32 %v1190, %v1321
    %v1480 = vmax.f32 %v1191, %v1324
    %v1481 = vmax.f32 %v1192, %v1326
    %v1482 = vmax.f32 %v1193, %v1329
    %v1483 = vmax.f32 %v1194, %v1331
    %v1484 = vmax.f32 %v1195, %v1334
    %v1485 = vmax.f32 %v1196, %v1336
    %v1486 = vmax.f32 %v1197, %v1339
    %v1487 = vmax.f32 %v1198, %v1341
    %v1488 = vmax.f32 %v1199, %v1344
    %v1489 = vmax.f32 %v1200, %v1346
    %v1490 = vmax.f32 %v1201, %v1349
    %v1491 = vmax.f32 %v1202, %v1351
    %v1492 = vmax.f32 %v1203, %v1354
    %v1493 = vmax.f32 %v1204, %v1356
    %v1494 = vmax.f32 %v1205, %v1359
    %v1495 = vmax.f32 %v1206, %v1361
    %v1496 = vmax.f32 %v1207, %v1364
    %v1497 = vmax.f32 %v1208, %v1366
    %v1498 = vmax.f32 %v1209, %v1369
    %v1499 = vmax.f32 %v1210, %v1371
    %vm1500 = vcmask 1044480
    %v1501 = vrot.slane %v794, 3
    %v1502 = vrot.slane %v604, 3
    %v1503 = vsel %vm1500, %v1501, %v1502
    %v1504 = vrot.slane %v826, 3
    %v1505 = vsel %vm1500, %v1502, %v1504
    %v1506 = vrot.slane %v795, 3
    %v1507 = vrot.slane %v607, 3
    %v1508 = vsel %vm1500, %v1506, %v1507
    %v1509 = vrot.slane %v827, 3
    %v1510 = vsel %vm1500, %v1507, %v1509
    %v1511 = vrot.slane %v796, 3
    %v1512 = vrot.slane %v610, 3
    %v1513 = vsel %vm1500, %v1511, %v1512
    %v1514 = vrot.slane %v828, 3
    %v1515 = vsel %vm1500, %v1512, %v1514
    %v1516 = vrot.slane %v797, 3
    %v1517 = vrot.slane %v613, 3
    %v1518 = vsel %vm1500, %v1516, %v1517
    %v1519 = vrot.slane %v829, 3
    %v1520 = vsel %vm1500, %v1517, %v1519
    %v1521 = vrot.slane %v798, 3
    %v1522 = vrot.slane %v616, 3
    %v1523 = vsel %vm1500, %v1521, %v1522
    %v1524 = vrot.slane %v830, 3
    %v1525 = vsel %vm1500, %v1522, %v1524
    %v1526 = vrot.slane %v799, 3
    %v1527 = vrot.slane %v619, 3
    %v1528 = vsel %vm1500, %v1526, %v1527
    %v1529 = vrot.slane %v831, 3
    %v1530 = vsel %vm1500, %v1527, %v1529
    %v1531 = vrot.slane %v800, 3
    %v1532 = vrot.slane %v622, 3
    %v1533 = vsel %vm1500, %v1531, %v1532
    %v1534 = vrot.slane %v832, 3
    %v1535 = vsel %vm1500, %v1532, %v1534
    %v1536 = vrot.slane %v801, 3
    %v1537 = vrot.slane %v625, 3
    %v1538 = vsel %vm1500, %v1536, %v1537
    %v1539 = vrot.slane %v833, 3
    %v1540 = vsel %vm1500, %v1537, %v1539
    %v1541 = vrot.slane %v802, 3
    %v1542 = vrot.slane %v628, 3
    %v1543 = vsel %vm1500, %v1541, %v1542
    %v1544 = vrot.slane %v834, 3
    %v1545 = vsel %vm1500, %v1542, %v1544
    %v1546 = vrot.slane %v803, 3
    %v1547 = vrot.slane %v631, 3
    %v1548 = vsel %vm1500, %v1546, %v1547
    %v1549 = vrot.slane %v835, 3
    %v1550 = vsel %vm1500, %v1547, %v1549
    %v1551 = vrot.slane %v804, 3
    %v1552 = vrot.slane %v634, 3
    %v1553 = vsel %vm1500, %v1551, %v1552
    %v1554 = vrot.slane %v836, 3
    %v1555 = vsel %vm1500, %v1552, %v1554
    %v1556 = vrot.slane %v805, 3
    %v1557 = vrot.slane %v637, 3
    %v1558 = vsel %vm1500, %v1556, %v1557
    %v1559 = vrot.slane %v837, 3
    %v1560 = vsel %vm1500, %v1557, %v1559
    %v1561 = vrot.slane %v806, 3
    %v1562 = vrot.slane %v640, 3
    %v1563 = vsel %vm1500, %v1561, %v1562
    %v1564 = vrot.slane %v838, 3
    %v1565 = vsel %vm1500, %v1562, %v1564
    %v1566 = vrot.slane %v807, 3
    %v1567 = vrot.slane %v643, 3
    %v1568 = vsel %vm1500, %v1566, %v1567
    %v1569 = vrot.slane %v839, 3
    %v1570 = vsel %vm1500, %v1567, %v1569
    %v1571 = vrot.slane %v808, 3
    %v1572 = vrot.slane %v646, 3
    %v1573 = vsel %vm1500, %v1571, %v1572
    %v1574 = vrot.slane %v840, 3
    %v1575 = vsel %vm1500, %v1572, %v1574
    %v1576 = vrot.slane %v809, 3
    %v1577 = vrot.slane %v649, 3
    %v1578 = vsel %vm1500, %v1576, %v1577
    %v1579 = vrot.slane %v841, 3
    %v1580 = vsel %vm1500, %v1577, %v1579
    %v1581 = vrot.slane %v810, 3
    %v1582 = vrot.slane %v652, 3
    %v1583 = vsel %vm1500, %v1581, %v1582
    %v1584 = vrot.slane %v842, 3
    %v1585 = vsel %vm1500, %v1582, %v1584
    %v1586 = vrot.slane %v811, 3
    %v1587 = vrot.slane %v655, 3
    %v1588 = vsel %vm1500, %v1586, %v1587
    %v1589 = vrot.slane %v843, 3
    %v1590 = vsel %vm1500, %v1587, %v1589
    %v1591 = vrot.slane %v812, 3
    %v1592 = vrot.slane %v658, 3
    %v1593 = vsel %vm1500, %v1591, %v1592
    %v1594 = vrot.slane %v844, 3
    %v1595 = vsel %vm1500, %v1592, %v1594
    %v1596 = vrot.slane %v813, 3
    %v1597 = vrot.slane %v661, 3
    %v1598 = vsel %vm1500, %v1596, %v1597
    %v1599 = vrot.slane %v845, 3
    %v1600 = vsel %vm1500, %v1597, %v1599
    %v1601 = vrot.slane %v814, 3
    %v1602 = vrot.slane %v664, 3
    %v1603 = vsel %vm1500, %v1601, %v1602
    %v1604 = vrot.slane %v846, 3
    %v1605 = vsel %vm1500, %v1602, %v1604
    %v1606 = vrot.slane %v815, 3
    %v1607 = vrot.slane %v667, 3
    %v1608 = vsel %vm1500, %v1606, %v1607
    %v1609 = vrot.slane %v847, 3
    %v1610 = vsel %vm1500, %v1607, %v1609
    %v1611 = vrot.slane %v816, 3
    %v1612 = vrot.slane %v670, 3
    %v1613 = vsel %vm1500, %v1611, %v1612
    %v1614 = vrot.slane %v848, 3
    %v1615 = vsel %vm1500, %v1612, %v1614
    %v1616 = vrot.slane %v817, 3
    %v1617 = vrot.slane %v673, 3
    %v1618 = vsel %vm1500, %v1616, %v1617
    %v1619 = vrot.slane %v849, 3
    %v1620 = vsel %vm1500, %v1617, %v1619
    %v1621 = vrot.slane %v818, 3
    %v1622 = vrot.slane %v676, 3
    %v1623 = vsel %vm1500, %v1621, %v1622
    %v1624 = vrot.slane %v850, 3
    %v1625 = vsel %vm1500, %v1622, %v1624
    %v1626 = vrot.slane %v819, 3
    %v1627 = vrot.slane %v679, 3
    %v1628 = vsel %vm1500, %v1626, %v1627
    %v1629 = vrot.slane %v851, 3
    %v1630 = vsel %vm1500, %v1627, %v1629
    %v1631 = vrot.slane %v820, 3
    %v1632 = vrot.slane %v682, 3
    %v1633 = vsel %vm1500, %v1631, %v1632
    %v1634 = vrot.slane %v852, 3
    %v1635 = vsel %vm1500, %v1632, %v1634
    %v1636 = vrot.slane %v821, 3
    %v1637 = vrot.slane %v685, 3
    %v1638 = vsel %vm1500, %v1636, %v1637
    %v1639 = vrot.slane %v853, 3
    %v1640 = vsel %vm1500, %v1637, %v1639
    %v1641 = vrot.slane %v822, 3
    %v1642 = vrot.slane %v688, 3
    %v1643 = vsel %vm1500, %v1641, %v1642
    %v1644 = vrot.slane %v854, 3
    %v1645 = vsel %vm1500, %v1642, %v1644
    %v1646 = vrot.slane %v823, 3
    %v1647 = vrot.slane %v691, 3
    %v1648 = vsel %vm1500, %v1646, %v1647
    %v1649 = vrot.slane %v855, 3
    %v1650 = vsel %vm1500, %v1647, %v1649
    %v1651 = vrot.slane %v824, 3
    %v1652 = vrot.slane %v694, 3
    %v1653 = vsel %vm1500, %v1651, %v1652
    %v1654 = vrot.slane %v856, 3
    %v1655 = vsel %vm1500, %v1652, %v1654
    %v1656 = vrot.slane %v825, 3
    %v1657 = vrot.slane %v697, 3
    %v1658 = vsel %vm1500, %v1656, %v1657
    %v1659 = vrot.slane %v857, 3
    %v1660 = vsel %vm1500, %v1657, %v1659
    %v1725 = vmax.f32 %v1436, %v1503
    %v1726 = vmax.f32 %v1437, %v1505
    %v1727 = vmax.f32 %v1438, %v1508
    %v1728 = vmax.f32 %v1439, %v1510
    %v1729 = vmax.f32 %v1440, %v1513
    %v1730 = vmax.f32 %v1441, %v1515
    %v1731 = vmax.f32 %v1442, %v1518
    %v1732 = vmax.f32 %v1443, %v1520
    %v1733 = vmax.f32 %v1444, %v1523
    %v1734 = vmax.f32 %v1445, %v1525
    %v1735 = vmax.f32 %v1446, %v1528
    %v1736 = vmax.f32 %v1447, %v1530
    %v1737 = vmax.f32 %v1448, %v1533
    %v1738 = vmax.f32 %v1449, %v1535
    %v1739 = vmax.f32 %v1450, %v1538
    %v1740 = vmax.f32 %v1451, %v1540
    %v1741 = vmax.f32 %v1452, %v1543
    %v1742 = vmax.f32 %v1453, %v1545
    %v1743 = vmax.f32 %v1454, %v1548
    %v1744 = vmax.f32 %v1455, %v1550
    %v1745 = vmax.f32 %v1456, %v1553
    %v1746 = vmax.f32 %v1457, %v1555
    %v1747 = vmax.f32 %v1458, %v1558
    %v1748 = vmax.f32 %v1459, %v1560
    %v1749 = vmax.f32 %v1460, %v1563
    %v1750 = vmax.f32 %v1461, %v1565
    %v1751 = vmax.f32 %v1462, %v1568
    %v1752 = vmax.f32 %v1463, %v1570
    %v1753 = vmax.f32 %v1464, %v1573
    %v1754 = vmax.f32 %v1465, %v1575
    %v1755 = vmax.f32 %v1466, %v1578
    %v1756 = vmax.f32 %v1467, %v1580
    %v1757 = vmax.f32 %v1468, %v1583
    %v1758 = vmax.f32 %v1469, %v1585
    %v1759 = vmax.f32 %v1470, %v1588
    %v1760 = vmax.f32 %v1471, %v1590
    %v1761 = vmax.f32 %v1472, %v1593
    %v1762 = vmax.f32 %v1473, %v1595
    %v1763 = vmax.f32 %v1474, %v1598
    %v1764 = vmax.f32 %v1475, %v1600
    %v1765 = vmax.f32 %v1476, %v1603
    %v1766 = vmax.f32 %v1477, %v1605
    %v1767 = vmax.f32 %v1478, %v1608
    %v1768 = vmax.f32 %v1479, %v1610
    %v1769 = vmax.f32 %v1480, %v1613
    %v1770 = vmax.f32 %v1481, %v1615
    %v1771 = vmax.f32 %v1482, %v1618
    %v1772 = vmax.f32 %v1483, %v1620
    %v1773 = vmax.f32 %v1484, %v1623
    %v1774 = vmax.f32 %v1485, %v1625
    %v1775 = vmax.f32 %v1486, %v1628
    %v1776 = vmax.f32 %v1487, %v1630
    %v1777 = vmax.f32 %v1488, %v1633
    %v1778 = vmax.f32 %v1489, %v1635
    %v1779 = vmax.f32 %v1490, %v1638
    %v1780 = vmax.f32 %v1491, %v1640
    %v1781 = vmax.f32 %v1492, %v1643
    %v1782 = vmax.f32 %v1493, %v1645
    %v1783 = vmax.f32 %v1494, %v1648
    %v1784 = vmax.f32 %v1495, %v1650
    %v1785 = vmax.f32 %v1496, %v1653
    %v1786 = vmax.f32 %v1497, %v1655
    %v1787 = vmax.f32 %v1498, %v1658
    %v1788 = vmax.f32 %v1499, %v1660
    %vm1789 = vcmask 1043456
    %v1790 = vrot.slane %v794, 4
    %v1791 = vrot.slane %v604, 4
    %v1792 = vsel %vm1789, %v1790, %v1791
    %v1793 = vrot.slane %v826, 4
    %v1794 = vsel %vm1789, %v1791, %v1793
    %v1795 = vrot.slane %v795, 4
    %v1796 = vrot.slane %v607, 4
    %v1797 = vsel %vm1789, %v1795, %v1796
    %v1798 = vrot.slane %v827, 4
    %v1799 = vsel %vm1789, %v1796, %v1798
    %v1800 = vrot.slane %v796, 4
    %v1801 = vrot.slane %v610, 4
    %v1802 = vsel %vm1789, %v1800, %v1801
    %v1803 = vrot.slane %v828, 4
    %v1804 = vsel %vm1789, %v1801, %v1803
    %v1805 = vrot.slane %v797, 4
    %v1806 = vrot.slane %v613, 4
    %v1807 = vsel %vm1789, %v1805, %v1806
    %v1808 = vrot.slane %v829, 4
    %v1809 = vsel %vm1789, %v1806, %v1808
    %v1810 = vrot.slane %v798, 4
    %v1811 = vrot.slane %v616, 4
    %v1812 = vsel %vm1789, %v1810, %v1811
    %v1813 = vrot.slane %v830, 4
    %v1814 = vsel %vm1789, %v1811, %v1813
    %v1815 = vrot.slane %v799, 4
    %v1816 = vrot.slane %v619, 4
    %v1817 = vsel %vm1789, %v1815, %v1816
    %v1818 = vrot.slane %v831, 4
    %v1819 = vsel %vm1789, %v1816, %v1818
    %v1820 = vrot.slane %v800, 4
    %v1821 = vrot.slane %v622, 4
    %v1822 = vsel %vm1789, %v1820, %v1821
    %v1823 = vrot.slane %v832, 4
    %v1824 = vsel %vm1789, %v1821, %v1823
    %v1825 = vrot.slane %v801, 4
    %v1826 = vrot.slane %v625, 4
    %v1827 = vsel %vm1789, %v1825, %v1826
    %v1828 = vrot.slane %v833, 4
    %v1829 = vsel %vm1789, %v1826, %v1828
    %v1830 = vrot.slane %v802, 4
    %v1831 = vrot.slane %v628, 4
    %v1832 = vsel %vm1789, %v1830, %v1831
    %v1833 = vrot.slane %v834, 4
    %v1834 = vsel %vm1789, %v1831, %v1833
    %v1835 = vrot.slane %v803, 4
    %v1836 = vrot.slane %v631, 4
    %v1837 = vsel %vm1789, %v1835, %v1836
    %v1838 = vrot.slane %v835, 4
    %v1839 = vsel %vm1789, %v1836, %v1838
    %v1840 = vrot.slane %v804, 4
    %v1841 = vrot.slane %v634, 4
    %v1842 = vsel %vm1789, %v1840, %v1841
    %v1843 = vrot.slane %v836, 4
    %v1844 = vsel %vm1789, %v1841, %v1843
    %v1845 = vrot.slane %v805, 4
    %v1846 = vrot.slane %v637, 4
    %v1847 = vsel %vm1789, %v1845, %v1846
    %v1848 = vrot.slane %v837, 4
    %v1849 = vsel %vm1789, %v1846, %v1848
    %v1850 = vrot.slane %v806, 4
    %v1851 = vrot.slane %v640, 4
    %v1852 = vsel %vm1789, %v1850, %v1851
    %v1853 = vrot.slane %v838, 4
    %v1854 = vsel %vm1789, %v1851, %v1853
    %v1855 = vrot.slane %v807, 4
    %v1856 = vrot.slane %v643, 4
    %v1857 = vsel %vm1789, %v1855, %v1856
    %v1858 = vrot.slane %v839, 4
    %v1859 = vsel %vm1789, %v1856, %v1858
    %v1860 = vrot.slane %v808, 4
    %v1861 = vrot.slane %v646, 4
    %v1862 = vsel %vm1789, %v1860, %v1861
    %v1863 = vrot.slane %v840, 4
    %v1864 = vsel %vm1789, %v1861, %v1863
    %v1865 = vrot.slane %v809, 4
    %v1866 = vrot.slane %v649, 4
    %v1867 = vsel %vm1789, %v1865, %v1866
    %v1868 = vrot.slane %v841, 4
    %v1869 = vsel %vm1789, %v1866, %v1868
    %v1870 = vrot.slane %v810, 4
    %v1871 = vrot.slane %v652, 4
    %v1872 = vsel %vm1789, %v1870, %v1871
    %v1873 = vrot.slane %v842, 4
    %v1874 = vsel %vm1789, %v1871, %v1873
    %v1875 = vrot.slane %v811, 4
    %v1876 = vrot.slane %v655, 4
    %v1877 = vsel %vm1789, %v1875, %v1876
    %v1878 = vrot.slane %v843, 4
    %v1879 = vsel %vm1789, %v1876, %v1878
    %v1880 = vrot.slane %v812, 4
    %v1881 = vrot.slane %v658, 4
    %v1882 = vsel %vm1789, %v1880, %v1881
    %v1883 = vrot.slane %v844, 4
    %v1884 = vsel %vm1789, %v1881, %v1883
    %v1885 = vrot.slane %v813, 4
    %v1886 = vrot.slane %v661, 4
    %v1887 = vsel %vm1789, %v1885, %v1886
    %v1888 = vrot.slane %v845, 4
    %v1889 = vsel %vm1789, %v1886, %v1888
    %v1890 = vrot.slane %v814, 4
    %v1891 = vrot.slane %v664, 4
    %v1892 = vsel %vm1789, %v1890, %v1891
    %v1893 = vrot.slane %v846, 4
    %v1894 = vsel %vm1789, %v1891, %v1893
    %v1895 = vrot.slane %v815, 4
    %v1896 = vrot.slane %v667, 4
    %v1897 = vsel %vm1789, %v1895, %v1896
    %v1898 = vrot.slane %v847, 4
    %v1899 = vsel %vm1789, %v1896, %v1898
    %v1900 = vrot.slane %v816, 4
    %v1901 = vrot.slane %v670, 4
    %v1902 = vsel %vm1789, %v1900, %v1901
    %v1903 = vrot.slane %v848, 4
    %v1904 = vsel %vm1789, %v1901, %v1903
    %v1905 = vrot.slane %v817, 4
    %v1906 = vrot.slane %v673, 4
    %v1907 = vsel %vm1789, %v1905, %v1906
    %v1908 = vrot.slane %v849, 4
    %v1909 = vsel %vm1789, %v1906, %v1908
    %v1910 = vrot.slane %v818, 4
    %v1911 = vrot.slane %v676, 4
    %v1912 = vsel %vm1789, %v1910, %v1911
    %v1913 = vrot.slane %v850, 4
    %v1914 = vsel %vm1789, %v1911, %v1913
    %v1915 = vrot.slane %v819, 4
    %v1916 = vrot.slane %v679, 4
    %v1917 = vsel %vm1789, %v1915, %v1916
    %v1918 = vrot.slane %v851, 4
    %v1919 = vsel %vm1789, %v1916, %v1918
    %v1920 = vrot.slane %v820, 4
    %v1921 = vrot.slane %v682, 4
    %v1922 = vsel %vm1789, %v1920, %v1921
    %v1923 = vrot.slane %v852, 4
    %v1924 = vsel %vm1789, %v1921, %v1923
    %v1925 = vrot.slane %v821, 4
    %v1926 = vrot.slane %v685, 4
    %v1927 = vsel %vm1789, %v1925, %v1926
    %v1928 = vrot.slane %v853, 4
    %v1929 = vsel %vm1789, %v1926, %v1928
    %v1930 = vrot.slane %v822, 4
    %v1931 = vrot.slane %v688, 4
    %v1932 = vsel %vm1789, %v1930, %v1931
    %v1933 = vrot.slane %v854, 4
    %v1934 = vsel %vm1789, %v1931, %v1933
    %v1935 = vrot.slane %v823, 4
    %v1936 = vrot.slane %v691, 4
    %v1937 = vsel %vm1789, %v1935, %v1936
    %v1938 = vrot.slane %v855, 4
    %v1939 = vsel %vm1789, %v1936, %v1938
    %v1940 = vrot.slane %v824, 4
    %v1941 = vrot.slane %v694, 4
    %v1942 = vsel %vm1789, %v1940, %v1941
    %v1943 = vrot.slane %v856, 4
    %v1944 = vsel %vm1789, %v1941, %v1943
    %v1945 = vrot.slane %v825, 4
    %v1946 = vrot.slane %v697, 4
    %v1947 = vsel %vm1789, %v1945, %v1946
    %v1948 = vrot.slane %v857, 4
    %v1949 = vsel %vm1789, %v1946, %v1948
    %v2014 = vmax.f32 %v1725, %v1792
    %v2015 = vmax.f32 %v1726, %v1794
    %v2016 = vmax.f32 %v1727, %v1797
    %v2017 = vmax.f32 %v1728, %v1799
    %v2018 = vmax.f32 %v1729, %v1802
    %v2019 = vmax.f32 %v1730, %v1804
    %v2020 = vmax.f32 %v1731, %v1807
    %v2021 = vmax.f32 %v1732, %v1809
    %v2022 = vmax.f32 %v1733, %v1812
    %v2023 = vmax.f32 %v1734, %v1814
    %v2024 = vmax.f32 %v1735, %v1817
    %v2025 = vmax.f32 %v1736, %v1819
    %v2026 = vmax.f32 %v1737, %v1822
    %v2027 = vmax.f32 %v1738, %v1824
    %v2028 = vmax.f32 %v1739, %v1827
    %v2029 = vmax.f32 %v1740, %v1829
    %v2030 = vmax.f32 %v1741, %v1832
    %v2031 = vmax.f32 %v1742, %v1834
    %v2032 = vmax.f32 %v1743, %v1837
    %v2033 = vmax.f32 %v1744, %v1839
    %v2034 = vmax.f32 %v1745, %v1842
    %v2035 = vmax.f32 %v1746, %v1844
    %v2036 = vmax.f32 %v1747, %v1847
    %v2037 = vmax.f32 %v1748, %v1849
    %v2038 = vmax.f32 %v1749, %v1852
    %v2039 = vmax.f32 %v1750, %v1854
    %v2040 = vmax.f32 %v1751, %v1857
    %v2041 = vmax.f32 %v1752, %v1859
    %v2042 = vmax.f32 %v1753, %v1862
    %v2043 = vmax.f32 %v1754, %v1864
    %v2044 = vmax.f32 %v1755, %v1867
    %v2045 = vmax.f32 %v1756, %v1869
    %v2046 = vmax.f32 %v1757, %v1872
    %v2047 = vmax.f32 %v1758, %v1874
    %v2048 = vmax.f32 %v1759, %v1877
    %v2049 = vmax.f32 %v1760, %v1879
    %v2050 = vmax.f32 %v1761, %v1882
    %v2051 = vmax.f32 %v1762, %v1884
    %v2052 = vmax.f32 %v1763, %v1887
    %v2053 = vmax.f32 %v1764, %v1889
    %v2054 = vmax.f32 %v1765, %v1892
    %v2055 = vmax.f32 %v1766, %v1894
    %v2056 = vmax.f32 %v1767, %v1897
    %v2057 = vmax.f32 %v1768, %v1899
    %v2058 = vmax.f32 %v1769, %v1902
    %v2059 = vmax.f32 %v1770, %v1904
    %v2060 = vmax.f32 %v1771, %v1907
    %v2061 = vmax.f32 %v1772, %v1909
    %v2062 = vmax.f32 %v1773, %v1912
    %v2063 = vmax.f32 %v1774, %v1914
    %v2064 = vmax.f32 %v1775, %v1917
    %v2065 = vmax.f32 %v1776, %v1919
    %v2066 = vmax.f32 %v1777, %v1922
    %v2067 = vmax.f32 %v1778, %v1924
    %v2068 = vmax.f32 %v1779, %v1927
    %v2069 = vmax.f32 %v1780, %v1929
    %v2070 = vmax.f32 %v1781, %v1932
    %v2071 = vmax.f32 %v1782, %v1934
    %v2072 = vmax.f32 %v1783, %v1937
    %v2073 = vmax.f32 %v1784, %v1939
    %v2074 = vmax.f32 %v1785, %v1942
    %v2075 = vmax.f32 %v1786, %v1944
    %v2076 = vmax.f32 %v1787, %v1947
    %v2077 = vmax.f32 %v1788, %v1949
    %v2078 = vrot.slane %v794, 5
    %v2079 = vrot.slane %v604, 5
    %v2080 = vsel %vm601, %v2078, %v2079
    %v2081 = vrot.slane %v826, 5
    %v2082 = vsel %vm601, %v2079, %v2081
    %v2083 = vrot.slane %v795, 5
    %v2084 = vrot.slane %v607, 5
    %v2085 = vsel %vm601, %v2083, %v2084
    %v2086 = vrot.slane %v827, 5
    %v2087 = vsel %vm601, %v2084, %v2086
    %v2088 = vrot.slane %v796, 5
    %v2089 = vrot.slane %v610, 5
    %v2090 = vsel %vm601, %v2088, %v2089
    %v2091 = vrot.slane %v828, 5
    %v2092 = vsel %vm601, %v2089, %v2091
    %v2093 = vrot.slane %v797, 5
    %v2094 = vrot.slane %v613, 5
    %v2095 = vsel %vm601, %v2093, %v2094
    %v2096 = vrot.slane %v829, 5
    %v2097 = vsel %vm601, %v2094, %v2096
    %v2098 = vrot.slane %v798, 5
    %v2099 = vrot.slane %v616, 5
    %v2100 = vsel %vm601, %v2098, %v2099
    %v2101 = vrot.slane %v830, 5
    %v2102 = vsel %vm601, %v2099, %v2101
    %v2103 = vrot.slane %v799, 5
    %v2104 = vrot.slane %v619, 5
    %v2105 = vsel %vm601, %v2103, %v2104
    %v2106 = vrot.slane %v831, 5
    %v2107 = vsel %vm601, %v2104, %v2106
    %v2108 = vrot.slane %v800, 5
    %v2109 = vrot.slane %v622, 5
    %v2110 = vsel %vm601, %v2108, %v2109
    %v2111 = vrot.slane %v832, 5
    %v2112 = vsel %vm601, %v2109, %v2111
    %v2113 = vrot.slane %v801, 5
    %v2114 = vrot.slane %v625, 5
    %v2115 = vsel %vm601, %v2113, %v2114
    %v2116 = vrot.slane %v833, 5
    %v2117 = vsel %vm601, %v2114, %v2116
    %v2118 = vrot.slane %v802, 5
    %v2119 = vrot.slane %v628, 5
    %v2120 = vsel %vm601, %v2118, %v2119
    %v2121 = vrot.slane %v834, 5
    %v2122 = vsel %vm601, %v2119, %v2121
    %v2123 = vrot.slane %v803, 5
    %v2124 = vrot.slane %v631, 5
    %v2125 = vsel %vm601, %v2123, %v2124
    %v2126 = vrot.slane %v835, 5
    %v2127 = vsel %vm601, %v2124, %v2126
    %v2128 = vrot.slane %v804, 5
    %v2129 = vrot.slane %v634, 5
    %v2130 = vsel %vm601, %v2128, %v2129
    %v2131 = vrot.slane %v836, 5
    %v2132 = vsel %vm601, %v2129, %v2131
    %v2133 = vrot.slane %v805, 5
    %v2134 = vrot.slane %v637, 5
    %v2135 = vsel %vm601, %v2133, %v2134
    %v2136 = vrot.slane %v837, 5
    %v2137 = vsel %vm601, %v2134, %v2136
    %v2138 = vrot.slane %v806, 5
    %v2139 = vrot.slane %v640, 5
    %v2140 = vsel %vm601, %v2138, %v2139
    %v2141 = vrot.slane %v838, 5
    %v2142 = vsel %vm601, %v2139, %v2141
    %v2143 = vrot.slane %v807, 5
    %v2144 = vrot.slane %v643, 5
    %v2145 = vsel %vm601, %v2143, %v2144
    %v2146 = vrot.slane %v839, 5
    %v2147 = vsel %vm601, %v2144, %v2146
    %v2148 = vrot.slane %v808, 5
    %v2149 = vrot.slane %v646, 5
    %v2150 = vsel %vm601, %v2148, %v2149
    %v2151 = vrot.slane %v840, 5
    %v2152 = vsel %vm601, %v2149, %v2151
    %v2153 = vrot.slane %v809, 5
    %v2154 = vrot.slane %v649, 5
    %v2155 = vsel %vm601, %v2153, %v2154
    %v2156 = vrot.slane %v841, 5
    %v2157 = vsel %vm601, %v2154, %v2156
    %v2158 = vrot.slane %v810, 5
    %v2159 = vrot.slane %v652, 5
    %v2160 = vsel %vm601, %v2158, %v2159
    %v2161 = vrot.slane %v842, 5
    %v2162 = vsel %vm601, %v2159, %v2161
    %v2163 = vrot.slane %v811, 5
    %v2164 = vrot.slane %v655, 5
    %v2165 = vsel %vm601, %v2163, %v2164
    %v2166 = vrot.slane %v843, 5
    %v2167 = vsel %vm601, %v2164, %v2166
    %v2168 = vrot.slane %v812, 5
    %v2169 = vrot.slane %v658, 5
    %v2170 = vsel %vm601, %v2168, %v2169
    %v2171 = vrot.slane %v844, 5
    %v2172 = vsel %vm601, %v2169, %v2171
    %v2173 = vrot.slane %v813, 5
    %v2174 = vrot.slane %v661, 5
    %v2175 = vsel %vm601, %v2173, %v2174
    %v2176 = vrot.slane %v845, 5
    %v2177 = vsel %vm601, %v2174, %v2176
    %v2178 = vrot.slane %v814, 5
    %v2179 = vrot.slane %v664, 5
    %v2180 = vsel %vm601, %v2178, %v2179
    %v2181 = vrot.slane %v846, 5
    %v2182 = vsel %vm601, %v2179, %v2181
    %v2183 = vrot.slane %v815, 5
    %v2184 = vrot.slane %v667, 5
    %v2185 = vsel %vm601, %v2183, %v2184
    %v2186 = vrot.slane %v847, 5
    %v2187 = vsel %vm601, %v2184, %v2186
    %v2188 = vrot.slane %v816, 5
    %v2189 = vrot.slane %v670, 5
    %v2190 = vsel %vm601, %v2188, %v2189
    %v2191 = vrot.slane %v848, 5
    %v2192 = vsel %vm601, %v2189, %v2191
    %v2193 = vrot.slane %v817, 5
    %v2194 = vrot.slane %v673, 5
    %v2195 = vsel %vm601, %v2193, %v2194
    %v2196 = vrot.slane %v849, 5
    %v2197 = vsel %vm601, %v2194, %v2196
    %v2198 = vrot.slane %v818, 5
    %v2199 = vrot.slane %v676, 5
    %v2200 = vsel %vm601, %v2198, %v2199
    %v2201 = vrot.slane %v850, 5
    %v2202 = vsel %vm601, %v2199, %v2201
    %v2203 = vrot.slane %v819, 5
    %v2204 = vrot.slane %v679, 5
    %v2205 = vsel %vm601, %v2203, %v2204
    %v2206 = vrot.slane %v851, 5
    %v2207 = vsel %vm601, %v2204, %v2206
    %v2208 = vrot.slane %v820, 5
    %v2209 = vrot.slane %v682, 5
    %v2210 = vsel %vm601, %v2208, %v2209
    %v2211 = vrot.slane %v852, 5
    %v2212 = vsel %vm601, %v2209, %v2211
    %v2213 = vrot.slane %v821, 5
    %v2214 = vrot.slane %v685, 5
    %v2215 = vsel %vm601, %v2213, %v2214
    %v2216 = vrot.slane %v853, 5
    %v2217 = vsel %vm601, %v2214, %v2216
    %v2218 = vrot.slane %v822, 5
    %v2219 = vrot.slane %v688, 5
    %v2220 = vsel %vm601, %v2218, %v2219
    %v2221 = vrot.slane %v854, 5
    %v2222 = vsel %vm601, %v2219, %v2221
    %v2223 = vrot.slane %v823, 5
    %v2224 = vrot.slane %v691, 5
    %v2225 = vsel %vm601, %v2223, %v2224
    %v2226 = vrot.slane %v855, 5
    %v2227 = vsel %vm601, %v2224, %v2226
    %v2228 = vrot.slane %v824, 5
    %v2229 = vrot.slane %v694, 5
    %v2230 = vsel %vm601, %v2228, %v2229
    %v2231 = vrot.slane %v856, 5
    %v2232 = vsel %vm601, %v2229, %v2231
    %v2233 = vrot.slane %v825, 5
    %v2234 = vrot.slane %v697, 5
    %v2235 = vsel %vm601, %v2233, %v2234
    %v2236 = vrot.slane %v857, 5
    %v2237 = vsel %vm601, %v2234, %v2236
    %v2302 = vmax.f32 %v2014, %v2080
    %v2303 = vmax.f32 %v2015, %v2082
    %v2304 = vmax.f32 %v2016, %v2085
    %v2305 = vmax.f32 %v2017, %v2087
    %v2306 = vmax.f32 %v2018, %v2090
    %v2307 = vmax.f32 %v2019, %v2092
    %v2308 = vmax.f32 %v2020, %v2095
    %v2309 = vmax.f32 %v2021, %v2097
    %v2310 = vmax.f32 %v2022, %v2100
    %v2311 = vmax.f32 %v2023, %v2102
    %v2312 = vmax.f32 %v2024, %v2105
    %v2313 = vmax.f32 %v2025, %v2107
    %v2314 = vmax.f32 %v2026, %v2110
    %v2315 = vmax.f32 %v2027, %v2112
    %v2316 = vmax.f32 %v2028, %v2115
    %v2317 = vmax.f32 %v2029, %v2117
    %v2318 = vmax.f32 %v2030, %v2120
    %v2319 = vmax.f32 %v2031, %v2122
    %v2320 = vmax.f32 %v2032, %v2125
    %v2321 = vmax.f32 %v2033, %v2127
    %v2322 = vmax.f32 %v2034, %v2130
    %v2323 = vmax.f32 %v2035, %v2132
    %v2324 = vmax.f32 %v2036, %v2135
    %v2325 = vmax.f32 %v2037, %v2137
    %v2326 = vmax.f32 %v2038, %v2140
    %v2327 = vmax.f32 %v2039, %v2142
    %v2328 = vmax.f32 %v2040, %v2145
    %v2329 = vmax.f32 %v2041, %v2147
    %v2330 = vmax.f32 %v2042, %v2150
    %v2331 = vmax.f32 %v2043, %v2152
    %v2332 = vmax.f32 %v2044, %v2155
    %v2333 = vmax.f32 %v2045, %v2157
    %v2334 = vmax.f32 %v2046, %v2160
    %v2335 = vmax.f32 %v2047, %v2162
    %v2336 = vmax.f32 %v2048, %v2165
    %v2337 = vmax.f32 %v2049, %v2167
    %v2338 = vmax.f32 %v2050, %v2170
    %v2339 = vmax.f32 %v2051, %v2172
    %v2340 = vmax.f32 %v2052, %v2175
    %v2341 = vmax.f32 %v2053, %v2177
    %v2342 = vmax.f32 %v2054, %v2180
    %v2343 = vmax.f32 %v2055, %v2182
    %v2344 = vmax.f32 %v2056, %v2185
    %v2345 = vmax.f32 %v2057, %v2187
    %v2346 = vmax.f32 %v2058, %v2190
    %v2347 = vmax.f32 %v2059, %v2192
    %v2348 = vmax.f32 %v2060, %v2195
    %v2349 = vmax.f32 %v2061, %v2197
    %v2350 = vmax.f32 %v2062, %v2200
    %v2351 = vmax.f32 %v2063, %v2202
    %v2352 = vmax.f32 %v2064, %v2205
    %v2353 = vmax.f32 %v2065, %v2207
    %v2354 = vmax.f32 %v2066, %v2210
    %v2355 = vmax.f32 %v2067, %v2212
    %v2356 = vmax.f32 %v2068, %v2215
    %v2357 = vmax.f32 %v2069, %v2217
    %v2358 = vmax.f32 %v2070, %v2220
    %v2359 = vmax.f32 %v2071, %v2222
    %v2360 = vmax.f32 %v2072, %v2225
    %v2361 = vmax.f32 %v2073, %v2227
    %v2362 = vmax.f32 %v2074, %v2230
    %v2363 = vmax.f32 %v2075, %v2232
    %v2364 = vmax.f32 %v2076, %v2235
    %v2365 = vmax.f32 %v2077, %v2237
    %vm2366 = vcmask 1041408
    %v2367 = vrot.slane %v794, 6
    %v2368 = vrot.slane %v604, 6
    %v2369 = vsel %vm2366, %v2367, %v2368
    %v2370 = vrot.slane %v826, 6
    %v2371 = vsel %vm2366, %v2368, %v2370
    %v2372 = vrot.slane %v795, 6
    %v2373 = vrot.slane %v607, 6
    %v2374 = vsel %vm2366, %v2372, %v2373
    %v2375 = vrot.slane %v827, 6
    %v2376 = vsel %vm2366, %v2373, %v2375
    %v2377 = vrot.slane %v796, 6
    %v2378 = vrot.slane %v610, 6
    %v2379 = vsel %vm2366, %v2377, %v2378
    %v2380 = vrot.slane %v828, 6
    %v2381 = vsel %vm2366, %v2378, %v2380
    %v2382 = vrot.slane %v797, 6
    %v2383 = vrot.slane %v613, 6
    %v2384 = vsel %vm2366, %v2382, %v2383
    %v2385 = vrot.slane %v829, 6
    %v2386 = vsel %vm2366, %v2383, %v2385
    %v2387 = vrot.slane %v798, 6
    %v2388 = vrot.slane %v616, 6
    %v2389 = vsel %vm2366, %v2387, %v2388
    %v2390 = vrot.slane %v830, 6
    %v2391 = vsel %vm2366, %v2388, %v2390
    %v2392 = vrot.slane %v799, 6
    %v2393 = vrot.slane %v619, 6
    %v2394 = vsel %vm2366, %v2392, %v2393
    %v2395 = vrot.slane %v831, 6
    %v2396 = vsel %vm2366, %v2393, %v2395
    %v2397 = vrot.slane %v800, 6
    %v2398 = vrot.slane %v622, 6
    %v2399 = vsel %vm2366, %v2397, %v2398
    %v2400 = vrot.slane %v832, 6
    %v2401 = vsel %vm2366, %v2398, %v2400
    %v2402 = vrot.slane %v801, 6
    %v2403 = vrot.slane %v625, 6
    %v2404 = vsel %vm2366, %v2402, %v2403
    %v2405 = vrot.slane %v833, 6
    %v2406 = vsel %vm2366, %v2403, %v2405
    %v2407 = vrot.slane %v802, 6
    %v2408 = vrot.slane %v628, 6
    %v2409 = vsel %vm2366, %v2407, %v2408
    %v2410 = vrot.slane %v834, 6
    %v2411 = vsel %vm2366, %v2408, %v2410
    %v2412 = vrot.slane %v803, 6
    %v2413 = vrot.slane %v631, 6
    %v2414 = vsel %vm2366, %v2412, %v2413
    %v2415 = vrot.slane %v835, 6
    %v2416 = vsel %vm2366, %v2413, %v2415
    %v2417 = vrot.slane %v804, 6
    %v2418 = vrot.slane %v634, 6
    %v2419 = vsel %vm2366, %v2417, %v2418
    %v2420 = vrot.slane %v836, 6
    %v2421 = vsel %vm2366, %v2418, %v2420
    %v2422 = vrot.slane %v805, 6
    %v2423 = vrot.slane %v637, 6
    %v2424 = vsel %vm2366, %v2422, %v2423
    %v2425 = vrot.slane %v837, 6
    %v2426 = vsel %vm2366, %v2423, %v2425
    %v2427 = vrot.slane %v806, 6
    %v2428 = vrot.slane %v640, 6
    %v2429 = vsel %vm2366, %v2427, %v2428
    %v2430 = vrot.slane %v838, 6
    %v2431 = vsel %vm2366, %v2428, %v2430
    %v2432 = vrot.slane %v807, 6
    %v2433 = vrot.slane %v643, 6
    %v2434 = vsel %vm2366, %v2432, %v2433
    %v2435 = vrot.slane %v839, 6
    %v2436 = vsel %vm2366, %v2433, %v2435
    %v2437 = vrot.slane %v808, 6
    %v2438 = vrot.slane %v646, 6
    %v2439 = vsel %vm2366, %v2437, %v2438
    %v2440 = vrot.slane %v840, 6
    %v2441 = vsel %vm2366, %v2438, %v2440
    %v2442 = vrot.slane %v809, 6
    %v2443 = vrot.slane %v649, 6
    %v2444 = vsel %vm2366, %v2442, %v2443
    %v2445 = vrot.slane %v841, 6
    %v2446 = vsel %vm2366, %v2443, %v2445
    %v2447 = vrot.slane %v810, 6
    %v2448 = vrot.slane %v652, 6
    %v2449 = vsel %vm2366, %v2447, %v2448
    %v2450 = vrot.slane %v842, 6
    %v2451 = vsel %vm2366, %v2448, %v2450
    %v2452 = vrot.slane %v811, 6
    %v2453 = vrot.slane %v655, 6
    %v2454 = vsel %vm2366, %v2452, %v2453
    %v2455 = vrot.slane %v843, 6
    %v2456 = vsel %vm2366, %v2453, %v2455
    %v2457 = vrot.slane %v812, 6
    %v2458 = vrot.slane %v658, 6
    %v2459 = vsel %vm2366, %v2457, %v2458
    %v2460 = vrot.slane %v844, 6
    %v2461 = vsel %vm2366, %v2458, %v2460
    %v2462 = vrot.slane %v813, 6
    %v2463 = vrot.slane %v661, 6
    %v2464 = vsel %vm2366, %v2462, %v2463
    %v2465 = vrot.slane %v845, 6
    %v2466 = vsel %vm2366, %v2463, %v2465
    %v2467 = vrot.slane %v814, 6
    %v2468 = vrot.slane %v664, 6
    %v2469 = vsel %vm2366, %v2467, %v2468
    %v2470 = vrot.slane %v846, 6
    %v2471 = vsel %vm2366, %v2468, %v2470
    %v2472 = vrot.slane %v815, 6
    %v2473 = vrot.slane %v667, 6
    %v2474 = vsel %vm2366, %v2472, %v2473
    %v2475 = vrot.slane %v847, 6
    %v2476 = vsel %vm2366, %v2473, %v2475
    %v2477 = vrot.slane %v816, 6
    %v2478 = vrot.slane %v670, 6
    %v2479 = vsel %vm2366, %v2477, %v2478
    %v2480 = vrot.slane %v848, 6
    %v2481 = vsel %vm2366, %v2478, %v2480
    %v2482 = vrot.slane %v817, 6
    %v2483 = vrot.slane %v673, 6
    %v2484 = vsel %vm2366, %v2482, %v2483
    %v2485 = vrot.slane %v849, 6
    %v2486 = vsel %vm2366, %v2483, %v2485
    %v2487 = vrot.slane %v818, 6
    %v2488 = vrot.slane %v676, 6
    %v2489 = vsel %vm2366, %v2487, %v2488
    %v2490 = vrot.slane %v850, 6
    %v2491 = vsel %vm2366, %v2488, %v2490
    %v2492 = vrot.slane %v819, 6
    %v2493 = vrot.slane %v679, 6
    %v2494 = vsel %vm2366, %v2492, %v2493
    %v2495 = vrot.slane %v851, 6
    %v2496 = vsel %vm2366, %v2493, %v2495
    %v2497 = vrot.slane %v820, 6
    %v2498 = vrot.slane %v682, 6
    %v2499 = vsel %vm2366, %v2497, %v2498
    %v2500 = vrot.slane %v852, 6
    %v2501 = vsel %vm2366, %v2498, %v2500
    %v2502 = vrot.slane %v821, 6
    %v2503 = vrot.slane %v685, 6
    %v2504 = vsel %vm2366, %v2502, %v2503
    %v2505 = vrot.slane %v853, 6
    %v2506 = vsel %vm2366, %v2503, %v2505
    %v2507 = vrot.slane %v822, 6
    %v2508 = vrot.slane %v688, 6
    %v2509 = vsel %vm2366, %v2507, %v2508
    %v2510 = vrot.slane %v854, 6
    %v2511 = vsel %vm2366, %v2508, %v2510
    %v2512 = vrot.slane %v823, 6
    %v2513 = vrot.slane %v691, 6
    %v2514 = vsel %vm2366, %v2512, %v2513
    %v2515 = vrot.slane %v855, 6
    %v2516 = vsel %vm2366, %v2513, %v2515
    %v2517 = vrot.slane %v824, 6
    %v2518 = vrot.slane %v694, 6
    %v2519 = vsel %vm2366, %v2517, %v2518
    %v2520 = vrot.slane %v856, 6
    %v2521 = vsel %vm2366, %v2518, %v2520
    %v2522 = vrot.slane %v825, 6
    %v2523 = vrot.slane %v697, 6
    %v2524 = vsel %vm2366, %v2522, %v2523
    %v2525 = vrot.slane %v857, 6
    %v2526 = vsel %vm2366, %v2523, %v2525
    %v2591 = vmax.f32 %v2302, %v2369
    %v2592 = vmax.f32 %v2303, %v2371
    %v2593 = vmax.f32 %v2304, %v2374
    %v2594 = vmax.f32 %v2305, %v2376
    %v2595 = vmax.f32 %v2306, %v2379
    %v2596 = vmax.f32 %v2307, %v2381
    %v2597 = vmax.f32 %v2308, %v2384
    %v2598 = vmax.f32 %v2309, %v2386
    %v2599 = vmax.f32 %v2310, %v2389
    %v2600 = vmax.f32 %v2311, %v2391
    %v2601 = vmax.f32 %v2312, %v2394
    %v2602 = vmax.f32 %v2313, %v2396
    %v2603 = vmax.f32 %v2314, %v2399
    %v2604 = vmax.f32 %v2315, %v2401
    %v2605 = vmax.f32 %v2316, %v2404
    %v2606 = vmax.f32 %v2317, %v2406
    %v2607 = vmax.f32 %v2318, %v2409
    %v2608 = vmax.f32 %v2319, %v2411
    %v2609 = vmax.f32 %v2320, %v2414
    %v2610 = vmax.f32 %v2321, %v2416
    %v2611 = vmax.f32 %v2322, %v2419
    %v2612 = vmax.f32 %v2323, %v2421
    %v2613 = vmax.f32 %v2324, %v2424
    %v2614 = vmax.f32 %v2325, %v2426
    %v2615 = vmax.f32 %v2326, %v2429
    %v2616 = vmax.f32 %v2327, %v2431
    %v2617 = vmax.f32 %v2328, %v2434
    %v2618 = vmax.f32 %v2329, %v2436
    %v2619 = vmax.f32 %v2330, %v2439
    %v2620 = vmax.f32 %v2331, %v2441
    %v2621 = vmax.f32 %v2332, %v2444
    %v2622 = vmax.f32 %v2333, %v2446
    %v2623 = vmax.f32 %v2334, %v2449
    %v2624 = vmax.f32 %v2335, %v2451
    %v2625 = vmax.f32 %v2336, %v2454
    %v2626 = vmax.f32 %v2337, %v2456
    %v2627 = vmax.f32 %v2338, %v2459
    %v2628 = vmax.f32 %v2339, %v2461
    %v2629 = vmax.f32 %v2340, %v2464
    %v2630 = vmax.f32 %v2341, %v2466
    %v2631 = vmax.f32 %v2342, %v2469
    %v2632 = vmax.f32 %v2343, %v2471
    %v2633 = vmax.f32 %v2344, %v2474
    %v2634 = vmax.f32 %v2345, %v2476
    %v2635 = vmax.f32 %v2346, %v2479
    %v2636 = vmax.f32 %v2347, %v2481
    %v2637 = vmax.f32 %v2348, %v2484
    %v2638 = vmax.f32 %v2349, %v2486
    %v2639 = vmax.f32 %v2350, %v2489
    %v2640 = vmax.f32 %v2351, %v2491
    %v2641 = vmax.f32 %v2352, %v2494
    %v2642 = vmax.f32 %v2353, %v2496
    %v2643 = vmax.f32 %v2354, %v2499
    %v2644 = vmax.f32 %v2355, %v2501
    %v2645 = vmax.f32 %v2356, %v2504
    %v2646 = vmax.f32 %v2357, %v2506
    %v2647 = vmax.f32 %v2358, %v2509
    %v2648 = vmax.f32 %v2359, %v2511
    %v2649 = vmax.f32 %v2360, %v2514
    %v2650 = vmax.f32 %v2361, %v2516
    %v2651 = vmax.f32 %v2362, %v2519
    %v2652 = vmax.f32 %v2363, %v2521
    %v2653 = vmax.f32 %v2364, %v2524
    %v2654 = vmax.f32 %v2365, %v2526
    %v2655 = vsub.f32 1.0, %v2591
    %v2656 = vsub.f32 1.0, %v2592
    %v2657 = vsub.f32 1.0, %v2593
    %v2658 = vsub.f32 1.0, %v2594
    %v2659 = vsub.f32 1.0, %v2595
    %v2660 = vsub.f32 1.0, %v2596
    %v2661 = vsub.f32 1.0, %v2597
    %v2662 = vsub.f32 1.0, %v2598
    %v2663 = vsub.f32 1.0, %v2599
    %v2664 = vsub.f32 1.0, %v2600
    %v2665 = vsub.f32 1.0, %v2601
    %v2666 = vsub.f32 1.0, %v2602
    %v2667 = vsub.f32 1.0, %v2603
    %v2668 = vsub.f32 1.0, %v2604
    %v2669 = vsub.f32 1.0, %v2605
    %v2670 = vsub.f32 1.0, %v2606
    %v2671 = vsub.f32 1.0, %v2607
    %v2672 = vsub.f32 1.0, %v2608
    %v2673 = vsub.f32 1.0, %v2609
    %v2674 = vsub.f32 1.0, %v2610
    %v2675 = vsub.f32 1.0, %v2611
    %v2676 = vsub.f32 1.0, %v2612
    %v2677 = vsub.f32 1.0, %v2613
    %v2678 = vsub.f32 1.0, %v2614
    %v2679 = vsub.f32 1.0, %v2615
    %v2680 = vsub.f32 1.0, %v2616
    %v2681 = vsub.f32 1.0, %v2617
    %v2682 = vsub.f32 1.0, %v2618
    %v2683 = vsub.f32 1.0, %v2619
    %v2684 = vsub.f32 1.0, %v2620
    %v2685 = vsub.f32 1.0, %v2621
    %v2686 = vsub.f32 1.0, %v2622
    %v2687 = vsub.f32 1.0, %v2623
    %v2688 = vsub.f32 1.0, %v2624
    %v2689 = vsub.f32 1.0, %v2625
    %v2690 = vsub.f32 1.0, %v2626
    %v2691 = vsub.f32 1.0, %v2627
    %v2692 = vsub.f32 1.0, %v2628
    %v2693 = vsub.f32 1.0, %v2629
    %v2694 = vsub.f32 1.0, %v2630
    %v2695 = vsub.f32 1.0, %v2631
    %v2696 = vsub.f32 1.0, %v2632
    %v2697 = vsub.f32 1.0, %v2633
    %v2698 = vsub.f32 1.0, %v2634
    %v2699 = vsub.f32 1.0, %v2635
    %v2700 = vsub.f32 1.0, %v2636
    %v2701 = vsub.f32 1.0, %v2637
    %v2702 = vsub.f32 1.0, %v2638
    %v2703 = vsub.f32 1.0, %v2639
    %v2704 = vsub.f32 1.0, %v2640
    %v2705 = vsub.f32 1.0, %v2641
    %v2706 = vsub.f32 1.0, %v2642
    %v2707 = vsub.f32 1.0, %v2643
    %v2708 = vsub.f32 1.0, %v2644
    %v2709 = vsub.f32 1.0, %v2645
    %v2710 = vsub.f32 1.0, %v2646
    %v2711 = vsub.f32 1.0, %v2647
    %v2712 = vsub.f32 1.0, %v2648
    %v2713 = vsub.f32 1.0, %v2649
    %v2714 = vsub.f32 1.0, %v2650
    %v2715 = vsub.f32 1.0, %v2651
    %v2716 = vsub.f32 1.0, %v2652
    %v2717 = vsub.f32 1.0, %v2653
    %v2718 = vsub.f32 1.0, %v2654
    %vm2719 = vcmask 31744
    %v2720 = vsel %vm2719, %v2655, 0.0
    %v2721 = vsel %vm2719, %v2656, 0.0
    %v2722 = vadd.f32 %v2720, %v2721
    %v2723 = vsel %vm2719, %v2657, 0.0
    %v2724 = vadd.f32 %v2722, %v2723
    %v2725 = vsel %vm2719, %v2658, 0.0
    %v2726 = vadd.f32 %v2724, %v2725
    %v2727 = vsel %vm2719, %v2659, 0.0
    %v2728 = vadd.f32 %v2726, %v2727
    %v2729 = vsel %vm2719, %v2660, 0.0
    %v2730 = vadd.f32 %v2728, %v2729
    %v2731 = vsel %vm2719, %v2661, 0.0
    %v2732 = vadd.f32 %v2730, %v2731
    %v2733 = vsel %vm2719, %v2662, 0.0
    %v2734 = vadd.f32 %v2732, %v2733
    %v2735 = vsel %vm2719, %v2663, 0.0
    %v2736 = vadd.f32 %v2734, %v2735
    %v2737 = vsel %vm2719, %v2664, 0.0
    %v2738 = vadd.f32 %v2736, %v2737
    %v2739 = vsel %vm2719, %v2665, 0.0
    %v2740 = vadd.f32 %v2738, %v2739
    %v2741 = vsel %vm2719, %v2666, 0.0
    %v2742 = vadd.f32 %v2740, %v2741
    %v2743 = vsel %vm2719, %v2667, 0.0
    %v2744 = vadd.f32 %v2742, %v2743
    %v2745 = vsel %vm2719, %v2668, 0.0
    %v2746 = vadd.f32 %v2744, %v2745
    %v2747 = vsel %vm2719, %v2669, 0.0
    %v2748 = vadd.f32 %v2746, %v2747
    %v2749 = vsel %vm2719, %v2670, 0.0
    %v2750 = vadd.f32 %v2748, %v2749
    %v2751 = vsel %vm2719, %v2671, 0.0
    %v2752 = vadd.f32 %v2750, %v2751
    %v2753 = vsel %vm2719, %v2672, 0.0
    %v2754 = vadd.f32 %v2752, %v2753
    %v2755 = vsel %vm2719, %v2673, 0.0
    %v2756 = vadd.f32 %v2754, %v2755
    %v2757 = vsel %vm2719, %v2674, 0.0
    %v2758 = vadd.f32 %v2756, %v2757
    %v2759 = vsel %vm2719, %v2675, 0.0
    %v2760 = vadd.f32 %v2758, %v2759
    %v2761 = vsel %vm2719, %v2676, 0.0
    %v2762 = vadd.f32 %v2760, %v2761
    %v2763 = vsel %vm2719, %v2677, 0.0
    %v2764 = vadd.f32 %v2762, %v2763
    %v2765 = vsel %vm2719, %v2678, 0.0
    %v2766 = vadd.f32 %v2764, %v2765
    %v2767 = vsel %vm2719, %v2679, 0.0
    %v2768 = vadd.f32 %v2766, %v2767
    %v2769 = vsel %vm2719, %v2680, 0.0
    %v2770 = vadd.f32 %v2768, %v2769
    %v2771 = vsel %vm2719, %v2681, 0.0
    %v2772 = vadd.f32 %v2770, %v2771
    %v2773 = vsel %vm2719, %v2682, 0.0
    %v2774 = vadd.f32 %v2772, %v2773
    %v2775 = vsel %vm2719, %v2683, 0.0
    %v2776 = vadd.f32 %v2774, %v2775
    %v2777 = vsel %vm2719, %v2684, 0.0
    %v2778 = vadd.f32 %v2776, %v2777
    %v2779 = vsel %vm2719, %v2685, 0.0
    %v2780 = vadd.f32 %v2778, %v2779
    %v2781 = vsel %vm2719, %v2686, 0.0
    %v2782 = vadd.f32 %v2780, %v2781
    %v2783 = vsel %vm2719, %v2687, 0.0
    %v2784 = vadd.f32 %v2782, %v2783
    %v2785 = vsel %vm2719, %v2688, 0.0
    %v2786 = vadd.f32 %v2784, %v2785
    %v2787 = vsel %vm2719, %v2689, 0.0
    %v2788 = vadd.f32 %v2786, %v2787
    %v2789 = vsel %vm2719, %v2690, 0.0
    %v2790 = vadd.f32 %v2788, %v2789
    %v2791 = vsel %vm2719, %v2691, 0.0
    %v2792 = vadd.f32 %v2790, %v2791
    %v2793 = vsel %vm2719, %v2692, 0.0
    %v2794 = vadd.f32 %v2792, %v2793
    %v2795 = vsel %vm2719, %v2693, 0.0
    %v2796 = vadd.f32 %v2794, %v2795
    %v2797 = vsel %vm2719, %v2694, 0.0
    %v2798 = vadd.f32 %v2796, %v2797
    %v2799 = vsel %vm2719, %v2695, 0.0
    %v2800 = vadd.f32 %v2798, %v2799
    %v2801 = vsel %vm2719, %v2696, 0.0
    %v2802 = vadd.f32 %v2800, %v2801
    %v2803 = vsel %vm2719, %v2697, 0.0
    %v2804 = vadd.f32 %v2802, %v2803
    %v2805 = vsel %vm2719, %v2698, 0.0
    %v2806 = vadd.f32 %v2804, %v2805
    %v2807 = vsel %vm2719, %v2699, 0.0
    %v2808 = vadd.f32 %v2806, %v2807
    %v2809 = vsel %vm2719, %v2700, 0.0
    %v2810 = vadd.f32 %v2808, %v2809
    %v2811 = vsel %vm2719, %v2701, 0.0
    %v2812 = vadd.f32 %v2810, %v2811
    %v2813 = vsel %vm2719, %v2702, 0.0
    %v2814 = vadd.f32 %v2812, %v2813
    %v2815 = vsel %vm2719, %v2703, 0.0
    %v2816 = vadd.f32 %v2814, %v2815
    %v2817 = vsel %vm2719, %v2704, 0.0
    %v2818 = vadd.f32 %v2816, %v2817
    %v2819 = vsel %vm2719, %v2705, 0.0
    %v2820 = vadd.f32 %v2818, %v2819
    %v2821 = vsel %vm2719, %v2706, 0.0
    %v2822 = vadd.f32 %v2820, %v2821
    %v2823 = vsel %vm2719, %v2707, 0.0
    %v2824 = vadd.f32 %v2822, %v2823
    %v2825 = vsel %vm2719, %v2708, 0.0
    %v2826 = vadd.f32 %v2824, %v2825
    %v2827 = vsel %vm2719, %v2709, 0.0
    %v2828 = vadd.f32 %v2826, %v2827
    %v2829 = vsel %vm2719, %v2710, 0.0
    %v2830 = vadd.f32 %v2828, %v2829
    %v2831 = vsel %vm2719, %v2711, 0.0
    %v2832 = vadd.f32 %v2830, %v2831
    %v2833 = vsel %vm2719, %v2712, 0.0
    %v2834 = vadd.f32 %v2832, %v2833
    %v2835 = vsel %vm2719, %v2713, 0.0
    %v2836 = vadd.f32 %v2834, %v2835
    %v2837 = vsel %vm2719, %v2714, 0.0
    %v2838 = vadd.f32 %v2836, %v2837
    %v2839 = vsel %vm2719, %v2715, 0.0
    %v2840 = vadd.f32 %v2838, %v2839
    %v2841 = vsel %vm2719, %v2716, 0.0
    %v2842 = vadd.f32 %v2840, %v2841
    %v2843 = vsel %vm2719, %v2717, 0.0
    %v2844 = vadd.f32 %v2842, %v2843
    %v2845 = vsel %vm2719, %v2718, 0.0
    %v2846 = vadd.f32 %v2844, %v2845
    %2847 = vadd.xlane.f32.xlu0 %v2846
    %v2848 = vpop.xlane.xlu0 %2847
    %v2849 = vrot.slane %v2848, 4
    %v2850 = vadd.f32 %v2848, %v2849
    %v2851 = vrot.slane %v2850, 2
    %v2852 = vadd.f32 %v2850, %v2851
    %v2853 = vrot.slane %v2852, 1
    %v2854 = vadd.f32 %v2852, %v2853
    %s2855 = vtos %v2854
    %s2856 = scalar_lea.smem [#allocation2], 0
    %2857 = sst [smem:[%s2856]] %s2855
    // Predicated region
    $region6: #{tpu_custom_call.1} parent=1 // pred_check
      _
    $region7: #{tpu_custom_call.1} parent=1 // pred_check_branch
      %2859 = sbr.rel (0) target = $region9
    $region8: #{tpu_custom_call.1} parent=1 // pred_region
      %s2861 = ssub.s32 16, 16
      %2862 = vsyncadd [#allocation3], %s2861
      %2865 = dma.smem_to_hbm [#allocation2], 16, %s1, [#allocation3]
    $region9: #{tpu_custom_call.1} parent=1 // pred_fallthru
      _
    // Predicated region
    $region10: #{tpu_custom_call.1} parent=1 // pred_check
      _
    $region11: #{tpu_custom_call.1} parent=1 // pred_check_branch
      %2867 = sbr.rel (0) target = $region13
    $region12: #{tpu_custom_call.1} parent=1 // pred_region
      %2868 = dma.done [#allocation3], 16
    $region13: #{tpu_custom_call.1} parent=1 // pred_fallthru
      _
    %2869 = sfence
    %2870 = vsyncpa [#allocation3], 1

</llo_original>
